<compile_context>
chip_gen: v5e
topology: v5e:2x2
jax: 0.10.0
libtpu: 0.0.40
codegen_flags: <defaults>
</compile_context>

<pallas_src>
import functools
import math

import jax
import jax.numpy as jnp
from jax.experimental import pallas as pl
from jax.experimental.pallas import tpu as pltpu

# ---- hyper-params (the module's `globals`) ---------------------------------
VOCAB_SIZE = 64
N_EMBD     = 32          # input_size == n_embd (encoder output feeds the FC)
BLOCK_SIZE = 8           # sequence length
N_HEAD     = 2
N_LAYER    = 2
N_HIDDEN   = 32
N_OUTPUT   = 3
LN_EPS     = 1e-5


def _vmem():
    return pl.BlockSpec(memory_space=pltpu.MemorySpace.VMEM)


def _ln(x, g, b):
    mu = jnp.mean(x, axis=-1, keepdims=True)
    d = x - mu
    var = jnp.mean(d * d, axis=-1, keepdims=True)
    return d * jax.lax.rsqrt(var + LN_EPS) * g + b


# ---------------------------- fused forward kernel ---------------------------
def _fused_forward_kernel(
    tok_ref, tok_emb_ref, pos_emb_ref,
    ln1_g_ref, ln1_b_ref, wqkv_ref, bqkv_ref, wo_ref, bo_ref,
    ln2_g_ref, ln2_b_ref, w_ff1_ref, b_ff1_ref, w_ff2_ref, b_ff2_ref,
    lnf_g_ref, lnf_b_ref, fc_w1_ref, fc_b1_ref, fc_w2_ref, fc_b2_ref,
    logp_ref, attn_ref, *, batch, seq):
    B, T = batch, seq
    E, H = N_EMBD, N_HEAD
    Dh = E // H
    BT = B * T
    scale = 1.0 / math.sqrt(Dh)
    f32 = jnp.float32

    # ---- embedding: transposed one-hot gather (TN matmul on MXU) ------------
    vocab_iota = jax.lax.broadcasted_iota(jnp.int32, (VOCAB_SIZE, BT), 0)
    onehot_t = (tok_ref[...] == vocab_iota).astype(f32)              # (V, BT)
    x = jax.lax.dot_general(onehot_t, tok_emb_ref[...],
                            (((0,), (0,)), ((), ())),
                            preferred_element_type=f32)              # (BT, E)
    # positional add: broadcast over batch (no concatenation / tiling)
    x = (x.reshape(B, T, E) + pos_emb_ref[...]).reshape(BT, E)

    # ---- encoder layers (statically unrolled; everything VMEM-resident) ----
    attn_pieces = []
    for l in range(N_LAYER):
        h = _ln(x, ln1_g_ref[l], ln1_b_ref[l])
        qkv = (jnp.dot(h, wqkv_ref[l], preferred_element_type=f32)
               + bqkv_ref[l])                                        # (BT, 3E)
        head_outs = []
        for hd in range(H):                                          # H == 2
            lo = hd * Dh
            q = qkv[:, lo:lo + Dh].reshape(B, T, Dh)
            k = qkv[:, E + lo:E + lo + Dh].reshape(B, T, Dh)
            v = qkv[:, 2 * E + lo:2 * E + lo + Dh].reshape(B, T, Dh)
            s = jnp.einsum('bqd,bkd->bqk', q, k,
                           preferred_element_type=f32) * scale       # (B, T, T)
            s = s - jnp.max(s, axis=-1, keepdims=True)
            p = jnp.exp(s)
            p = p * pl.reciprocal(jnp.sum(p, axis=-1, keepdims=True),
                                  approx=True)
            attn_pieces.append(p.reshape(BT, T))                     # sublane merge
            o = jnp.einsum('bqk,bkd->bqd', p, v,
                           preferred_element_type=f32)               # (B, T, Dh)
            head_outs.append(o.reshape(BT, Dh))
        attn_out = jnp.concatenate(head_outs, axis=1)                # (BT, E)
        x = x + (jnp.dot(attn_out, wo_ref[l], preferred_element_type=f32)
                 + bo_ref[l])

        h2 = _ln(x, ln2_g_ref[l], ln2_b_ref[l])
        ff = (jnp.dot(h2, w_ff1_ref[l], preferred_element_type=f32)
              + b_ff1_ref[l])
        ff = jnp.maximum(ff, 0.0)
        x = x + (jnp.dot(ff, w_ff2_ref[l], preferred_element_type=f32)
                 + b_ff2_ref[l])

    # ---- single lane-dense store of ALL attention maps ----------------------
    attn_ref[...] = jnp.concatenate(attn_pieces, axis=1)             # (BT, L*H*T)

    # ---- final LN + mean-pool (MXU matmul) + MLP head + log-softmax ---------
    x = _ln(x, lnf_g_ref[...], lnf_b_ref[...])
    row_ids = jax.lax.broadcasted_iota(jnp.int32, (B, BT), 0)
    col_ids = jax.lax.broadcasted_iota(jnp.int32, (B, BT), 1)
    in_row = (col_ids >= row_ids * T) & (col_ids < (row_ids + 1) * T)
    pool = in_row.astype(f32) * (1.0 / T)                            # (B, BT)
    pooled = jnp.dot(pool, x, preferred_element_type=f32)            # (B, E)

    hfc = (jnp.dot(pooled, fc_w1_ref[...], preferred_element_type=f32)
           + fc_b1_ref[...])
    hfc = jnp.maximum(hfc, 0.0)
    logits = (jnp.dot(hfc, fc_w2_ref[...], preferred_element_type=f32)
              + fc_b2_ref[...])
    z = logits - jnp.max(logits, axis=1, keepdims=True)
    logp_ref[...] = z - jnp.log(jnp.sum(jnp.exp(z), axis=1, keepdims=True))


# ---------------------------- parameter init --------------------------------
def init_params(key):
    def nrm(k, shape, scale=0.02):
        return (scale * jax.random.normal(k, shape)).astype(jnp.float32)

    ks = iter(jax.random.split(key, 16))
    E, L = N_EMBD, N_LAYER
    return {
        "tok_emb": nrm(next(ks), (VOCAB_SIZE, E)),
        "pos_emb": nrm(next(ks), (BLOCK_SIZE, E)),
        # per-layer weights stacked on a leading layer axis (VMEM resident)
        "ln1_g": jnp.ones((L, 1, E), jnp.float32),
        "ln1_b": jnp.zeros((L, 1, E), jnp.float32),
        "wqkv":  nrm(next(ks), (L, E, 3 * E), 0.1),   # fused Q|K|V projection
        "bqkv":  jnp.zeros((L, 1, 3 * E), jnp.float32),
        "wo":    nrm(next(ks), (L, E, E), 0.1),
        "bo":    jnp.zeros((L, 1, E), jnp.float32),
        "ln2_g": jnp.ones((L, 1, E), jnp.float32),
        "ln2_b": jnp.zeros((L, 1, E), jnp.float32),
        "w_ff1": nrm(next(ks), (L, E, 4 * E), 0.1),
        "b_ff1": jnp.zeros((L, 1, 4 * E), jnp.float32),
        "w_ff2": nrm(next(ks), (L, 4 * E, E), 0.1),
        "b_ff2": jnp.zeros((L, 1, E), jnp.float32),
        # final LN + classifier head
        "lnf_g": jnp.ones((1, E), jnp.float32),
        "lnf_b": jnp.zeros((1, E), jnp.float32),
        "fc_w1": nrm(next(ks), (E, N_HIDDEN), 0.1),
        "fc_b1": jnp.zeros((1, N_HIDDEN), jnp.float32),
        "fc_w2": nrm(next(ks), (N_HIDDEN, N_OUTPUT), 0.1),
        "fc_b2": jnp.zeros((1, N_OUTPUT), jnp.float32),
    }


# ---------------------------- forward pass -----------------------------------
def nn1dan_forward(params, tokens):
    B, T = tokens.shape
    tok_flat = tokens.reshape(1, B * T).astype(jnp.int32)      # lane-major ids
    pos = params["pos_emb"][:T]                                # supports T <= block_size
    inputs = (
        tok_flat, params["tok_emb"], pos,
        params["ln1_g"], params["ln1_b"], params["wqkv"], params["bqkv"],
        params["wo"], params["bo"], params["ln2_g"], params["ln2_b"],
        params["w_ff1"], params["b_ff1"], params["w_ff2"], params["b_ff2"],
        params["lnf_g"], params["lnf_b"],
        params["fc_w1"], params["fc_b1"], params["fc_w2"], params["fc_b2"],
    )
    log_probs, attn_flat = pl.pallas_call(
        functools.partial(_fused_forward_kernel, batch=B, seq=T),
        out_shape=(
            jax.ShapeDtypeStruct((B, N_OUTPUT), jnp.float32),
            jax.ShapeDtypeStruct((B * T, N_LAYER * N_HEAD * T), jnp.float32),
        ),
        in_specs=[_vmem()] * len(inputs),
        out_specs=(_vmem(), _vmem()),
    )(*inputs)
    # (B*T, L*H*T) -> (L, B, H, T, T): cheap layout plumbing outside the kernel.
    attn = attn_flat.reshape(B, T, N_LAYER, N_HEAD, T).transpose(2, 0, 3, 1, 4)
    attn_maps = [attn[l] for l in range(N_LAYER)]
    return log_probs, attn_maps


# ---------------------------- pure-JAX reference (numerics check) ------------
def _reference_forward(params, tokens):
    B, T = tokens.shape
    E, H, Dh = N_EMBD, N_HEAD, N_EMBD // N_HEAD

    def ln(x, g, b):
        mu = x.mean(-1, keepdims=True)
        var = ((x - mu) ** 2).mean(-1, keepdims=True)
        return (x - mu) * jax.lax.rsqrt(var + LN_EPS) * g + b

    x = params["tok_emb"][tokens] + params["pos_emb"][None, :T, :]
    attn_maps = []
    for l in range(N_LAYER):
        h = ln(x, params["ln1_g"][l], params["ln1_b"][l])
        qkv = h @ params["wqkv"][l] + params["bqkv"][l]
        q, k, v = jnp.split(qkv, 3, axis=-1)
        q = q.reshape(B, T, H, Dh).transpose(0, 2, 1, 3)
        k = k.reshape(B, T, H, Dh).transpose(0, 2, 1, 3)
        v = v.reshape(B, T, H, Dh).transpose(0, 2, 1, 3)
        s = jnp.einsum("bhqd,bhkd->bhqk", q, k) * (1.0 / math.sqrt(Dh))
        p = jax.nn.softmax(s, axis=-1)
        attn_maps.append(p)
        o = jnp.einsum("bhqk,bhkd->bhqd", p, v).transpose(0, 2, 1, 3).reshape(B, T, E)
        x = x + o @ params["wo"][l] + params["bo"][l]
        h2 = ln(x, params["ln2_g"][l], params["ln2_b"][l])
        ff = jax.nn.relu(h2 @ params["w_ff1"][l] + params["b_ff1"][l])
        x = x + ff @ params["w_ff2"][l] + params["b_ff2"][l]
    x = ln(x, params["lnf_g"], params["lnf_b"])
    pooled = x.mean(axis=1)
    hfc = jax.nn.relu(pooled @ params["fc_w1"] + params["fc_b1"])
    logits = hfc @ params["fc_w2"] + params["fc_b2"]
    return jax.nn.log_softmax(logits, axis=1), attn_maps


# ---------------------------------- main -------------------------------------
if __name__ == "__main__":
    key = jax.random.PRNGKey(0)
    pkey, tkey = jax.random.split(key)
    params = init_params(pkey)

    B = 2
    tokens = jax.random.randint(tkey, (B, BLOCK_SIZE), 0, VOCAB_SIZE, dtype=jnp.int32)

    fwd = jax.jit(nn1dan_forward)
    log_probs, attn_maps = fwd(params, tokens)
    jax.block_until_ready(log_probs)
    for a in attn_maps:
        jax.block_until_ready(a)

    # shape / invariant checks
    assert log_probs.shape == (B, N_OUTPUT)
    assert len(attn_maps) == N_LAYER
    assert attn_maps[0].shape == (B, N_HEAD, BLOCK_SIZE, BLOCK_SIZE)
    assert jnp.allclose(jnp.exp(log_probs).sum(axis=1), 1.0, atol=1e-4)
    for a in attn_maps:
        # approx=True reciprocal in softmax -> slightly looser row-sum tolerance
        assert jnp.allclose(a.sum(axis=-1), 1.0, atol=5e-3)

    # numerical check against a pure-JAX reference (generous tol for MXU/EUP approx)
    ref_lp, ref_attn = _reference_forward(params, tokens)
    assert jnp.allclose(log_probs, ref_lp, atol=5e-2)
    for a, ra in zip(attn_maps, ref_attn):
        assert jnp.allclose(a, ra, atol=5e-2)

    print("KERNEL_OK")
</pallas_src>

<mosaic_0001>
module attributes {stable_mosaic.version = 11 : i64} {
  func.func @_fused_forward_kernel(%arg0: memref<1x16xi32, #tpu.memory_space<vmem>>, %arg1: memref<64x32xf32, #tpu.memory_space<vmem>>, %arg2: memref<8x32xf32, #tpu.memory_space<vmem>>, %arg3: memref<2x1x32xf32, #tpu.memory_space<vmem>>, %arg4: memref<2x1x32xf32, #tpu.memory_space<vmem>>, %arg5: memref<2x32x96xf32, #tpu.memory_space<vmem>>, %arg6: memref<2x1x96xf32, #tpu.memory_space<vmem>>, %arg7: memref<2x32x32xf32, #tpu.memory_space<vmem>>, %arg8: memref<2x1x32xf32, #tpu.memory_space<vmem>>, %arg9: memref<2x1x32xf32, #tpu.memory_space<vmem>>, %arg10: memref<2x1x32xf32, #tpu.memory_space<vmem>>, %arg11: memref<2x32x128xf32, #tpu.memory_space<vmem>>, %arg12: memref<2x1x128xf32, #tpu.memory_space<vmem>>, %arg13: memref<2x128x32xf32, #tpu.memory_space<vmem>>, %arg14: memref<2x1x32xf32, #tpu.memory_space<vmem>>, %arg15: memref<1x32xf32, #tpu.memory_space<vmem>>, %arg16: memref<1x32xf32, #tpu.memory_space<vmem>>, %arg17: memref<32x32xf32, #tpu.memory_space<vmem>>, %arg18: memref<1x32xf32, #tpu.memory_space<vmem>>, %arg19: memref<32x3xf32, #tpu.memory_space<vmem>>, %arg20: memref<1x3xf32, #tpu.memory_space<vmem>>, %arg21: memref<2x3xf32, #tpu.memory_space<vmem>>, %arg22: memref<16x32xf32, #tpu.memory_space<vmem>>) attributes {dimension_semantics = [], scalar_prefetch = 0 : i64, scratch_operands = 0 : i64, tpu.core_type = #tpu.core_type<tc>} {
    %0 = tpu.iota {dimensions = array<i32: 0>} : vector<64x16xi32>
    %c0 = arith.constant 0 : index
    %c0_0 = arith.constant 0 : index
    %1 = vector.load %arg0[%c0, %c0_0] : memref<1x16xi32, #tpu.memory_space<vmem>>, vector<1x16xi32>
    %2 = vector.broadcast %1 : vector<1x16xi32> to vector<64x16xi32>
    %3 = arith.cmpi eq, %2, %0 : vector<64x16xi32>
    %4 = arith.extui %3 : vector<64x16xi1> to vector<64x16xi32>
    %5 = arith.sitofp %4 : vector<64x16xi32> to vector<64x16xf32>
    %c0_1 = arith.constant 0 : index
    %c0_2 = arith.constant 0 : index
    %6 = vector.load %arg1[%c0_1, %c0_2] : memref<64x32xf32, #tpu.memory_space<vmem>>, vector<64x32xf32>
    %cst = arith.constant dense<0.000000e+00> : vector<16x32xf32>
    %7 = tpu.matmul %5, %6, %cst {dimension_numbers = #tpu.dot_dimension_numbers<[0], [0], [1], [1], [0, 1, 1, 1], [], []>} : vector<64x16xf32>, vector<64x32xf32>, vector<16x32xf32> -> vector<16x32xf32>
    %8 = vector.shape_cast %7 : vector<16x32xf32> to vector<2x8x32xf32>
    %c0_3 = arith.constant 0 : index
    %c0_4 = arith.constant 0 : index
    %9 = vector.load %arg2[%c0_3, %c0_4] : memref<8x32xf32, #tpu.memory_space<vmem>>, vector<8x32xf32>
    %10 = vector.shape_cast %9 : vector<8x32xf32> to vector<1x8x32xf32>
    %11 = vector.broadcast %10 : vector<1x8x32xf32> to vector<2x8x32xf32>
    %12 = arith.addf %8, %11 : vector<2x8x32xf32>
    %13 = vector.shape_cast %12 : vector<2x8x32xf32> to vector<16x32xf32>
    %c0_5 = arith.constant 0 : index
    %c0_6 = arith.constant 0 : index
    %c0_7 = arith.constant 0 : index
    %14 = vector.load %arg3[%c0_5, %c0_6, %c0_7] : memref<2x1x32xf32, #tpu.memory_space<vmem>>, vector<1x1x32xf32>
    %15 = vector.shape_cast %14 : vector<1x1x32xf32> to vector<1x32xf32>
    %c0_8 = arith.constant 0 : index
    %c0_9 = arith.constant 0 : index
    %c0_10 = arith.constant 0 : index
    %16 = vector.load %arg4[%c0_8, %c0_9, %c0_10] : memref<2x1x32xf32, #tpu.memory_space<vmem>>, vector<1x1x32xf32>
    %17 = vector.shape_cast %16 : vector<1x1x32xf32> to vector<1x32xf32>
    %cst_11 = arith.constant dense<0.000000e+00> : vector<16xf32>
    %18 = vector.multi_reduction <add>, %13, %cst_11 [1] : vector<16x32xf32> to vector<16xf32>
    %19 = vector.shape_cast %18 : vector<16xf32> to vector<16x1xf32>
    %cst_12 = arith.constant 3.200000e+01 : f32
    %20 = vector.broadcast %cst_12 : f32 to vector<16x1xf32>
    %21 = arith.divf %19, %20 : vector<16x1xf32>
    %22 = vector.broadcast %21 : vector<16x1xf32> to vector<16x32xf32>
    %23 = arith.subf %13, %22 : vector<16x32xf32>
    %24 = arith.mulf %23, %23 : vector<16x32xf32>
    %cst_13 = arith.constant dense<0.000000e+00> : vector<16xf32>
    %25 = vector.multi_reduction <add>, %24, %cst_13 [1] : vector<16x32xf32> to vector<16xf32>
    %26 = vector.shape_cast %25 : vector<16xf32> to vector<16x1xf32>
    %cst_14 = arith.constant 3.200000e+01 : f32
    %27 = vector.broadcast %cst_14 : f32 to vector<16x1xf32>
    %28 = arith.divf %26, %27 : vector<16x1xf32>
    %cst_15 = arith.constant 9.99999974E-6 : f32
    %29 = vector.broadcast %cst_15 : f32 to vector<16x1xf32>
    %30 = arith.addf %28, %29 : vector<16x1xf32>
    %31 = math.rsqrt %30 : vector<16x1xf32>
    %32 = vector.broadcast %31 : vector<16x1xf32> to vector<16x32xf32>
    %33 = arith.mulf %23, %32 : vector<16x32xf32>
    %34 = vector.broadcast %15 : vector<1x32xf32> to vector<16x32xf32>
    %35 = arith.mulf %33, %34 : vector<16x32xf32>
    %36 = vector.broadcast %17 : vector<1x32xf32> to vector<16x32xf32>
    %37 = arith.addf %35, %36 : vector<16x32xf32>
    %c0_16 = arith.constant 0 : index
    %c0_17 = arith.constant 0 : index
    %c0_18 = arith.constant 0 : index
    %38 = vector.load %arg5[%c0_16, %c0_17, %c0_18] : memref<2x32x96xf32, #tpu.memory_space<vmem>>, vector<1x32x96xf32>
    %39 = vector.shape_cast %38 : vector<1x32x96xf32> to vector<32x96xf32>
    %cst_19 = arith.constant dense<0.000000e+00> : vector<16x96xf32>
    %40 = tpu.matmul %37, %39, %cst_19 {dimension_numbers = #tpu.dot_dimension_numbers<[1], [0], [0], [1], [0, 0, 1, 1], [], []>} : vector<16x32xf32>, vector<32x96xf32>, vector<16x96xf32> -> vector<16x96xf32>
    %c0_20 = arith.constant 0 : index
    %c0_21 = arith.constant 0 : index
    %c0_22 = arith.constant 0 : index
    %41 = vector.load %arg6[%c0_20, %c0_21, %c0_22] : memref<2x1x96xf32, #tpu.memory_space<vmem>>, vector<1x1x96xf32>
    %42 = vector.shape_cast %41 : vector<1x1x96xf32> to vector<1x96xf32>
    %43 = vector.broadcast %42 : vector<1x96xf32> to vector<16x96xf32>
    %44 = arith.addf %40, %43 : vector<16x96xf32>
    %45 = vector.extract_strided_slice %44 {offsets = [0, 0], sizes = [16, 16], strides = [1, 1]} : vector<16x96xf32> to vector<16x16xf32>
    %46 = vector.shape_cast %45 : vector<16x16xf32> to vector<2x8x16xf32>
    %47 = vector.extract_strided_slice %44 {offsets = [0, 32], sizes = [16, 16], strides = [1, 1]} : vector<16x96xf32> to vector<16x16xf32>
    %48 = vector.shape_cast %47 : vector<16x16xf32> to vector<2x8x16xf32>
    %49 = vector.extract_strided_slice %44 {offsets = [0, 64], sizes = [16, 16], strides = [1, 1]} : vector<16x96xf32> to vector<16x16xf32>
    %50 = vector.shape_cast %49 : vector<16x16xf32> to vector<2x8x16xf32>
    "tpu.trace_start"() <{level = 10 : i32, message = "bqd,bkd->bqk"}> : () -> ()
    %cst_23 = arith.constant dense<0.000000e+00> : vector<2x8x8xf32>
    %51 = tpu.matmul %46, %48, %cst_23 {dimension_numbers = #tpu.dot_dimension_numbers<[2], [2], [1], [1], [0, 0, 0, 1, 1, 1], [0], [0]>} : vector<2x8x16xf32>, vector<2x8x16xf32>, vector<2x8x8xf32> -> vector<2x8x8xf32>
    "tpu.trace_stop"() : () -> ()
    %cst_24 = arith.constant 2.500000e-01 : f32
    %52 = vector.broadcast %cst_24 : f32 to vector<2x8x8xf32>
    %53 = arith.mulf %51, %52 : vector<2x8x8xf32>
    %cst_25 = arith.constant dense<0xFF800000> : vector<2x8xf32>
    %54 = vector.multi_reduction <maximumf>, %53, %cst_25 [2] : vector<2x8x8xf32> to vector<2x8xf32>
    %55 = vector.shape_cast %54 : vector<2x8xf32> to vector<2x8x1xf32>
    %56 = vector.broadcast %55 : vector<2x8x1xf32> to vector<2x8x8xf32>
    %57 = arith.subf %53, %56 : vector<2x8x8xf32>
    %58 = math.exp %57 : vector<2x8x8xf32>
    %cst_26 = arith.constant dense<0.000000e+00> : vector<2x8xf32>
    %59 = vector.multi_reduction <add>, %58, %cst_26 [2] : vector<2x8x8xf32> to vector<2x8xf32>
    %60 = vector.shape_cast %59 : vector<2x8xf32> to vector<2x8x1xf32>
    %61 = tpu.reciprocal %60 {approx = true} : vector<2x8x1xf32> -> vector<2x8x1xf32>
    %62 = vector.broadcast %61 : vector<2x8x1xf32> to vector<2x8x8xf32>
    %63 = arith.mulf %58, %62 : vector<2x8x8xf32>
    %64 = vector.shape_cast %63 : vector<2x8x8xf32> to vector<16x8xf32>
    "tpu.trace_start"() <{level = 10 : i32, message = "bqk,bkd->bqd"}> : () -> ()
    %cst_27 = arith.constant dense<0.000000e+00> : vector<2x8x16xf32>
    %65 = tpu.matmul %63, %50, %cst_27 {dimension_numbers = #tpu.dot_dimension_numbers<[2], [1], [1], [2], [0, 0, 0, 1, 1, 2], [0], [0]>} : vector<2x8x8xf32>, vector<2x8x16xf32>, vector<2x8x16xf32> -> vector<2x8x16xf32>
    "tpu.trace_stop"() : () -> ()
    %66 = vector.shape_cast %65 : vector<2x8x16xf32> to vector<16x16xf32>
    %67 = vector.extract_strided_slice %44 {offsets = [0, 16], sizes = [16, 16], strides = [1, 1]} : vector<16x96xf32> to vector<16x16xf32>
    %68 = vector.shape_cast %67 : vector<16x16xf32> to vector<2x8x16xf32>
    %69 = vector.extract_strided_slice %44 {offsets = [0, 48], sizes = [16, 16], strides = [1, 1]} : vector<16x96xf32> to vector<16x16xf32>
    %70 = vector.shape_cast %69 : vector<16x16xf32> to vector<2x8x16xf32>
    %71 = vector.extract_strided_slice %44 {offsets = [0, 80], sizes = [16, 16], strides = [1, 1]} : vector<16x96xf32> to vector<16x16xf32>
    %72 = vector.shape_cast %71 : vector<16x16xf32> to vector<2x8x16xf32>
    "tpu.trace_start"() <{level = 10 : i32, message = "bqd,bkd->bqk"}> : () -> ()
    %cst_28 = arith.constant dense<0.000000e+00> : vector<2x8x8xf32>
    %73 = tpu.matmul %68, %70, %cst_28 {dimension_numbers = #tpu.dot_dimension_numbers<[2], [2], [1], [1], [0, 0, 0, 1, 1, 1], [0], [0]>} : vector<2x8x16xf32>, vector<2x8x16xf32>, vector<2x8x8xf32> -> vector<2x8x8xf32>
    "tpu.trace_stop"() : () -> ()
    %cst_29 = arith.constant 2.500000e-01 : f32
    %74 = vector.broadcast %cst_29 : f32 to vector<2x8x8xf32>
    %75 = arith.mulf %73, %74 : vector<2x8x8xf32>
    %cst_30 = arith.constant dense<0xFF800000> : vector<2x8xf32>
    %76 = vector.multi_reduction <maximumf>, %75, %cst_30 [2] : vector<2x8x8xf32> to vector<2x8xf32>
    %77 = vector.shape_cast %76 : vector<2x8xf32> to vector<2x8x1xf32>
    %78 = vector.broadcast %77 : vector<2x8x1xf32> to vector<2x8x8xf32>
    %79 = arith.subf %75, %78 : vector<2x8x8xf32>
    %80 = math.exp %79 : vector<2x8x8xf32>
    %cst_31 = arith.constant dense<0.000000e+00> : vector<2x8xf32>
    %81 = vector.multi_reduction <add>, %80, %cst_31 [2] : vector<2x8x8xf32> to vector<2x8xf32>
    %82 = vector.shape_cast %81 : vector<2x8xf32> to vector<2x8x1xf32>
    %83 = tpu.reciprocal %82 {approx = true} : vector<2x8x1xf32> -> vector<2x8x1xf32>
    %84 = vector.broadcast %83 : vector<2x8x1xf32> to vector<2x8x8xf32>
    %85 = arith.mulf %80, %84 : vector<2x8x8xf32>
    %86 = vector.shape_cast %85 : vector<2x8x8xf32> to vector<16x8xf32>
    "tpu.trace_start"() <{level = 10 : i32, message = "bqk,bkd->bqd"}> : () -> ()
    %cst_32 = arith.constant dense<0.000000e+00> : vector<2x8x16xf32>
    %87 = tpu.matmul %85, %72, %cst_32 {dimension_numbers = #tpu.dot_dimension_numbers<[2], [1], [1], [2], [0, 0, 0, 1, 1, 2], [0], [0]>} : vector<2x8x8xf32>, vector<2x8x16xf32>, vector<2x8x16xf32> -> vector<2x8x16xf32>
    "tpu.trace_stop"() : () -> ()
    %88 = vector.shape_cast %87 : vector<2x8x16xf32> to vector<16x16xf32>
    %89 = tpu.concatenate %66, %88 in 1 : vector<16x16xf32>, vector<16x16xf32> -> vector<16x32xf32>
    %c0_33 = arith.constant 0 : index
    %c0_34 = arith.constant 0 : index
    %c0_35 = arith.constant 0 : index
    %90 = vector.load %arg7[%c0_33, %c0_34, %c0_35] : memref<2x32x32xf32, #tpu.memory_space<vmem>>, vector<1x32x32xf32>
    %91 = vector.shape_cast %90 : vector<1x32x32xf32> to vector<32x32xf32>
    %cst_36 = arith.constant dense<0.000000e+00> : vector<16x32xf32>
    %92 = tpu.matmul %89, %91, %cst_36 {dimension_numbers = #tpu.dot_dimension_numbers<[1], [0], [0], [1], [0, 0, 1, 1], [], []>} : vector<16x32xf32>, vector<32x32xf32>, vector<16x32xf32> -> vector<16x32xf32>
    %c0_37 = arith.constant 0 : index
    %c0_38 = arith.constant 0 : index
    %c0_39 = arith.constant 0 : index
    %93 = vector.load %arg8[%c0_37, %c0_38, %c0_39] : memref<2x1x32xf32, #tpu.memory_space<vmem>>, vector<1x1x32xf32>
    %94 = vector.shape_cast %93 : vector<1x1x32xf32> to vector<1x32xf32>
    %95 = vector.broadcast %94 : vector<1x32xf32> to vector<16x32xf32>
    %96 = arith.addf %92, %95 : vector<16x32xf32>
    %97 = arith.addf %13, %96 : vector<16x32xf32>
    %c0_40 = arith.constant 0 : index
    %c0_41 = arith.constant 0 : index
    %c0_42 = arith.constant 0 : index
    %98 = vector.load %arg9[%c0_40, %c0_41, %c0_42] : memref<2x1x32xf32, #tpu.memory_space<vmem>>, vector<1x1x32xf32>
    %99 = vector.shape_cast %98 : vector<1x1x32xf32> to vector<1x32xf32>
    %c0_43 = arith.constant 0 : index
    %c0_44 = arith.constant 0 : index
    %c0_45 = arith.constant 0 : index
    %100 = vector.load %arg10[%c0_43, %c0_44, %c0_45] : memref<2x1x32xf32, #tpu.memory_space<vmem>>, vector<1x1x32xf32>
    %101 = vector.shape_cast %100 : vector<1x1x32xf32> to vector<1x32xf32>
    %cst_46 = arith.constant dense<0.000000e+00> : vector<16xf32>
    %102 = vector.multi_reduction <add>, %97, %cst_46 [1] : vector<16x32xf32> to vector<16xf32>
    %103 = vector.shape_cast %102 : vector<16xf32> to vector<16x1xf32>
    %cst_47 = arith.constant 3.200000e+01 : f32
    %104 = vector.broadcast %cst_47 : f32 to vector<16x1xf32>
    %105 = arith.divf %103, %104 : vector<16x1xf32>
    %106 = vector.broadcast %105 : vector<16x1xf32> to vector<16x32xf32>
    %107 = arith.subf %97, %106 : vector<16x32xf32>
    %108 = arith.mulf %107, %107 : vector<16x32xf32>
    %cst_48 = arith.constant dense<0.000000e+00> : vector<16xf32>
    %109 = vector.multi_reduction <add>, %108, %cst_48 [1] : vector<16x32xf32> to vector<16xf32>
    %110 = vector.shape_cast %109 : vector<16xf32> to vector<16x1xf32>
    %cst_49 = arith.constant 3.200000e+01 : f32
    %111 = vector.broadcast %cst_49 : f32 to vector<16x1xf32>
    %112 = arith.divf %110, %111 : vector<16x1xf32>
    %cst_50 = arith.constant 9.99999974E-6 : f32
    %113 = vector.broadcast %cst_50 : f32 to vector<16x1xf32>
    %114 = arith.addf %112, %113 : vector<16x1xf32>
    %115 = math.rsqrt %114 : vector<16x1xf32>
    %116 = vector.broadcast %115 : vector<16x1xf32> to vector<16x32xf32>
    %117 = arith.mulf %107, %116 : vector<16x32xf32>
    %118 = vector.broadcast %99 : vector<1x32xf32> to vector<16x32xf32>
    %119 = arith.mulf %117, %118 : vector<16x32xf32>
    %120 = vector.broadcast %101 : vector<1x32xf32> to vector<16x32xf32>
    %121 = arith.addf %119, %120 : vector<16x32xf32>
    %c0_51 = arith.constant 0 : index
    %c0_52 = arith.constant 0 : index
    %c0_53 = arith.constant 0 : index
    %122 = vector.load %arg11[%c0_51, %c0_52, %c0_53] : memref<2x32x128xf32, #tpu.memory_space<vmem>>, vector<1x32x128xf32>
    %123 = vector.shape_cast %122 : vector<1x32x128xf32> to vector<32x128xf32>
    %cst_54 = arith.constant dense<0.000000e+00> : vector<16x128xf32>
    %124 = tpu.matmul %121, %123, %cst_54 {dimension_numbers = #tpu.dot_dimension_numbers<[1], [0], [0], [1], [0, 0, 1, 1], [], []>} : vector<16x32xf32>, vector<32x128xf32>, vector<16x128xf32> -> vector<16x128xf32>
    %c0_55 = arith.constant 0 : index
    %c0_56 = arith.constant 0 : index
    %c0_57 = arith.constant 0 : index
    %125 = vector.load %arg12[%c0_55, %c0_56, %c0_57] : memref<2x1x128xf32, #tpu.memory_space<vmem>>, vector<1x1x128xf32>
    %126 = vector.shape_cast %125 : vector<1x1x128xf32> to vector<1x128xf32>
    %127 = vector.broadcast %126 : vector<1x128xf32> to vector<16x128xf32>
    %128 = arith.addf %124, %127 : vector<16x128xf32>
    %cst_58 = arith.constant 0.000000e+00 : f32
    %129 = vector.broadcast %cst_58 : f32 to vector<16x128xf32>
    %130 = arith.maximumf %128, %129 : vector<16x128xf32>
    %c0_59 = arith.constant 0 : index
    %c0_60 = arith.constant 0 : index
    %c0_61 = arith.constant 0 : index
    %131 = vector.load %arg13[%c0_59, %c0_60, %c0_61] : memref<2x128x32xf32, #tpu.memory_space<vmem>>, vector<1x128x32xf32>
    %132 = vector.shape_cast %131 : vector<1x128x32xf32> to vector<128x32xf32>
    %cst_62 = arith.constant dense<0.000000e+00> : vector<16x32xf32>
    %133 = tpu.matmul %130, %132, %cst_62 {dimension_numbers = #tpu.dot_dimension_numbers<[1], [0], [0], [1], [0, 0, 1, 1], [], []>} : vector<16x128xf32>, vector<128x32xf32>, vector<16x32xf32> -> vector<16x32xf32>
    %c0_63 = arith.constant 0 : index
    %c0_64 = arith.constant 0 : index
    %c0_65 = arith.constant 0 : index
    %134 = vector.load %arg14[%c0_63, %c0_64, %c0_65] : memref<2x1x32xf32, #tpu.memory_space<vmem>>, vector<1x1x32xf32>
    %135 = vector.shape_cast %134 : vector<1x1x32xf32> to vector<1x32xf32>
    %136 = vector.broadcast %135 : vector<1x32xf32> to vector<16x32xf32>
    %137 = arith.addf %133, %136 : vector<16x32xf32>
    %138 = arith.addf %97, %137 : vector<16x32xf32>
    %c1 = arith.constant 1 : index
    %c0_66 = arith.constant 0 : index
    %c0_67 = arith.constant 0 : index
    %139 = vector.load %arg3[%c1, %c0_66, %c0_67] : memref<2x1x32xf32, #tpu.memory_space<vmem>>, vector<1x1x32xf32>
    %140 = vector.shape_cast %139 : vector<1x1x32xf32> to vector<1x32xf32>
    %c1_68 = arith.constant 1 : index
    %c0_69 = arith.constant 0 : index
    %c0_70 = arith.constant 0 : index
    %141 = vector.load %arg4[%c1_68, %c0_69, %c0_70] : memref<2x1x32xf32, #tpu.memory_space<vmem>>, vector<1x1x32xf32>
    %142 = vector.shape_cast %141 : vector<1x1x32xf32> to vector<1x32xf32>
    %cst_71 = arith.constant dense<0.000000e+00> : vector<16xf32>
    %143 = vector.multi_reduction <add>, %138, %cst_71 [1] : vector<16x32xf32> to vector<16xf32>
    %144 = vector.shape_cast %143 : vector<16xf32> to vector<16x1xf32>
    %cst_72 = arith.constant 3.200000e+01 : f32
    %145 = vector.broadcast %cst_72 : f32 to vector<16x1xf32>
    %146 = arith.divf %144, %145 : vector<16x1xf32>
    %147 = vector.broadcast %146 : vector<16x1xf32> to vector<16x32xf32>
    %148 = arith.subf %138, %147 : vector<16x32xf32>
    %149 = arith.mulf %148, %148 : vector<16x32xf32>
    %cst_73 = arith.constant dense<0.000000e+00> : vector<16xf32>
    %150 = vector.multi_reduction <add>, %149, %cst_73 [1] : vector<16x32xf32> to vector<16xf32>
    %151 = vector.shape_cast %150 : vector<16xf32> to vector<16x1xf32>
    %cst_74 = arith.constant 3.200000e+01 : f32
    %152 = vector.broadcast %cst_74 : f32 to vector<16x1xf32>
    %153 = arith.divf %151, %152 : vector<16x1xf32>
    %cst_75 = arith.constant 9.99999974E-6 : f32
    %154 = vector.broadcast %cst_75 : f32 to vector<16x1xf32>
    %155 = arith.addf %153, %154 : vector<16x1xf32>
    %156 = math.rsqrt %155 : vector<16x1xf32>
    %157 = vector.broadcast %156 : vector<16x1xf32> to vector<16x32xf32>
    %158 = arith.mulf %148, %157 : vector<16x32xf32>
    %159 = vector.broadcast %140 : vector<1x32xf32> to vector<16x32xf32>
    %160 = arith.mulf %158, %159 : vector<16x32xf32>
    %161 = vector.broadcast %142 : vector<1x32xf32> to vector<16x32xf32>
    %162 = arith.addf %160, %161 : vector<16x32xf32>
    %c1_76 = arith.constant 1 : index
    %c0_77 = arith.constant 0 : index
    %c0_78 = arith.constant 0 : index
    %163 = vector.load %arg5[%c1_76, %c0_77, %c0_78] : memref<2x32x96xf32, #tpu.memory_space<vmem>>, vector<1x32x96xf32>
    %164 = vector.shape_cast %163 : vector<1x32x96xf32> to vector<32x96xf32>
    %cst_79 = arith.constant dense<0.000000e+00> : vector<16x96xf32>
    %165 = tpu.matmul %162, %164, %cst_79 {dimension_numbers = #tpu.dot_dimension_numbers<[1], [0], [0], [1], [0, 0, 1, 1], [], []>} : vector<16x32xf32>, vector<32x96xf32>, vector<16x96xf32> -> vector<16x96xf32>
    %c1_80 = arith.constant 1 : index
    %c0_81 = arith.constant 0 : index
    %c0_82 = arith.constant 0 : index
    %166 = vector.load %arg6[%c1_80, %c0_81, %c0_82] : memref<2x1x96xf32, #tpu.memory_space<vmem>>, vector<1x1x96xf32>
    %167 = vector.shape_cast %166 : vector<1x1x96xf32> to vector<1x96xf32>
    %168 = vector.broadcast %167 : vector<1x96xf32> to vector<16x96xf32>
    %169 = arith.addf %165, %168 : vector<16x96xf32>
    %170 = vector.extract_strided_slice %169 {offsets = [0, 0], sizes = [16, 16], strides = [1, 1]} : vector<16x96xf32> to vector<16x16xf32>
    %171 = vector.shape_cast %170 : vector<16x16xf32> to vector<2x8x16xf32>
    %172 = vector.extract_strided_slice %169 {offsets = [0, 32], sizes = [16, 16], strides = [1, 1]} : vector<16x96xf32> to vector<16x16xf32>
    %173 = vector.shape_cast %172 : vector<16x16xf32> to vector<2x8x16xf32>
    %174 = vector.extract_strided_slice %169 {offsets = [0, 64], sizes = [16, 16], strides = [1, 1]} : vector<16x96xf32> to vector<16x16xf32>
    %175 = vector.shape_cast %174 : vector<16x16xf32> to vector<2x8x16xf32>
    "tpu.trace_start"() <{level = 10 : i32, message = "bqd,bkd->bqk"}> : () -> ()
    %cst_83 = arith.constant dense<0.000000e+00> : vector<2x8x8xf32>
    %176 = tpu.matmul %171, %173, %cst_83 {dimension_numbers = #tpu.dot_dimension_numbers<[2], [2], [1], [1], [0, 0, 0, 1, 1, 1], [0], [0]>} : vector<2x8x16xf32>, vector<2x8x16xf32>, vector<2x8x8xf32> -> vector<2x8x8xf32>
    "tpu.trace_stop"() : () -> ()
    %cst_84 = arith.constant 2.500000e-01 : f32
    %177 = vector.broadcast %cst_84 : f32 to vector<2x8x8xf32>
    %178 = arith.mulf %176, %177 : vector<2x8x8xf32>
    %cst_85 = arith.constant dense<0xFF800000> : vector<2x8xf32>
    %179 = vector.multi_reduction <maximumf>, %178, %cst_85 [2] : vector<2x8x8xf32> to vector<2x8xf32>
    %180 = vector.shape_cast %179 : vector<2x8xf32> to vector<2x8x1xf32>
    %181 = vector.broadcast %180 : vector<2x8x1xf32> to vector<2x8x8xf32>
    %182 = arith.subf %178, %181 : vector<2x8x8xf32>
    %183 = math.exp %182 : vector<2x8x8xf32>
    %cst_86 = arith.constant dense<0.000000e+00> : vector<2x8xf32>
    %184 = vector.multi_reduction <add>, %183, %cst_86 [2] : vector<2x8x8xf32> to vector<2x8xf32>
    %185 = vector.shape_cast %184 : vector<2x8xf32> to vector<2x8x1xf32>
    %186 = tpu.reciprocal %185 {approx = true} : vector<2x8x1xf32> -> vector<2x8x1xf32>
    %187 = vector.broadcast %186 : vector<2x8x1xf32> to vector<2x8x8xf32>
    %188 = arith.mulf %183, %187 : vector<2x8x8xf32>
    %189 = vector.shape_cast %188 : vector<2x8x8xf32> to vector<16x8xf32>
    "tpu.trace_start"() <{level = 10 : i32, message = "bqk,bkd->bqd"}> : () -> ()
    %cst_87 = arith.constant dense<0.000000e+00> : vector<2x8x16xf32>
    %190 = tpu.matmul %188, %175, %cst_87 {dimension_numbers = #tpu.dot_dimension_numbers<[2], [1], [1], [2], [0, 0, 0, 1, 1, 2], [0], [0]>} : vector<2x8x8xf32>, vector<2x8x16xf32>, vector<2x8x16xf32> -> vector<2x8x16xf32>
    "tpu.trace_stop"() : () -> ()
    %191 = vector.shape_cast %190 : vector<2x8x16xf32> to vector<16x16xf32>
    %192 = vector.extract_strided_slice %169 {offsets = [0, 16], sizes = [16, 16], strides = [1, 1]} : vector<16x96xf32> to vector<16x16xf32>
    %193 = vector.shape_cast %192 : vector<16x16xf32> to vector<2x8x16xf32>
    %194 = vector.extract_strided_slice %169 {offsets = [0, 48], sizes = [16, 16], strides = [1, 1]} : vector<16x96xf32> to vector<16x16xf32>
    %195 = vector.shape_cast %194 : vector<16x16xf32> to vector<2x8x16xf32>
    %196 = vector.extract_strided_slice %169 {offsets = [0, 80], sizes = [16, 16], strides = [1, 1]} : vector<16x96xf32> to vector<16x16xf32>
    %197 = vector.shape_cast %196 : vector<16x16xf32> to vector<2x8x16xf32>
    "tpu.trace_start"() <{level = 10 : i32, message = "bqd,bkd->bqk"}> : () -> ()
    %cst_88 = arith.constant dense<0.000000e+00> : vector<2x8x8xf32>
    %198 = tpu.matmul %193, %195, %cst_88 {dimension_numbers = #tpu.dot_dimension_numbers<[2], [2], [1], [1], [0, 0, 0, 1, 1, 1], [0], [0]>} : vector<2x8x16xf32>, vector<2x8x16xf32>, vector<2x8x8xf32> -> vector<2x8x8xf32>
    "tpu.trace_stop"() : () -> ()
    %cst_89 = arith.constant 2.500000e-01 : f32
    %199 = vector.broadcast %cst_89 : f32 to vector<2x8x8xf32>
    %200 = arith.mulf %198, %199 : vector<2x8x8xf32>
    %cst_90 = arith.constant dense<0xFF800000> : vector<2x8xf32>
    %201 = vector.multi_reduction <maximumf>, %200, %cst_90 [2] : vector<2x8x8xf32> to vector<2x8xf32>
    %202 = vector.shape_cast %201 : vector<2x8xf32> to vector<2x8x1xf32>
    %203 = vector.broadcast %202 : vector<2x8x1xf32> to vector<2x8x8xf32>
    %204 = arith.subf %200, %203 : vector<2x8x8xf32>
    %205 = math.exp %204 : vector<2x8x8xf32>
    %cst_91 = arith.constant dense<0.000000e+00> : vector<2x8xf32>
    %206 = vector.multi_reduction <add>, %205, %cst_91 [2] : vector<2x8x8xf32> to vector<2x8xf32>
    %207 = vector.shape_cast %206 : vector<2x8xf32> to vector<2x8x1xf32>
    %208 = tpu.reciprocal %207 {approx = true} : vector<2x8x1xf32> -> vector<2x8x1xf32>
    %209 = vector.broadcast %208 : vector<2x8x1xf32> to vector<2x8x8xf32>
    %210 = arith.mulf %205, %209 : vector<2x8x8xf32>
    %211 = vector.shape_cast %210 : vector<2x8x8xf32> to vector<16x8xf32>
    "tpu.trace_start"() <{level = 10 : i32, message = "bqk,bkd->bqd"}> : () -> ()
    %cst_92 = arith.constant dense<0.000000e+00> : vector<2x8x16xf32>
    %212 = tpu.matmul %210, %197, %cst_92 {dimension_numbers = #tpu.dot_dimension_numbers<[2], [1], [1], [2], [0, 0, 0, 1, 1, 2], [0], [0]>} : vector<2x8x8xf32>, vector<2x8x16xf32>, vector<2x8x16xf32> -> vector<2x8x16xf32>
    "tpu.trace_stop"() : () -> ()
    %213 = vector.shape_cast %212 : vector<2x8x16xf32> to vector<16x16xf32>
    %214 = tpu.concatenate %191, %213 in 1 : vector<16x16xf32>, vector<16x16xf32> -> vector<16x32xf32>
    %c1_93 = arith.constant 1 : index
    %c0_94 = arith.constant 0 : index
    %c0_95 = arith.constant 0 : index
    %215 = vector.load %arg7[%c1_93, %c0_94, %c0_95] : memref<2x32x32xf32, #tpu.memory_space<vmem>>, vector<1x32x32xf32>
    %216 = vector.shape_cast %215 : vector<1x32x32xf32> to vector<32x32xf32>
    %cst_96 = arith.constant dense<0.000000e+00> : vector<16x32xf32>
    %217 = tpu.matmul %214, %216, %cst_96 {dimension_numbers = #tpu.dot_dimension_numbers<[1], [0], [0], [1], [0, 0, 1, 1], [], []>} : vector<16x32xf32>, vector<32x32xf32>, vector<16x32xf32> -> vector<16x32xf32>
    %c1_97 = arith.constant 1 : index
    %c0_98 = arith.constant 0 : index
    %c0_99 = arith.constant 0 : index
    %218 = vector.load %arg8[%c1_97, %c0_98, %c0_99] : memref<2x1x32xf32, #tpu.memory_space<vmem>>, vector<1x1x32xf32>
    %219 = vector.shape_cast %218 : vector<1x1x32xf32> to vector<1x32xf32>
    %220 = vector.broadcast %219 : vector<1x32xf32> to vector<16x32xf32>
    %221 = arith.addf %217, %220 : vector<16x32xf32>
    %222 = arith.addf %138, %221 : vector<16x32xf32>
    %c1_100 = arith.constant 1 : index
    %c0_101 = arith.constant 0 : index
    %c0_102 = arith.constant 0 : index
    %223 = vector.load %arg9[%c1_100, %c0_101, %c0_102] : memref<2x1x32xf32, #tpu.memory_space<vmem>>, vector<1x1x32xf32>
    %224 = vector.shape_cast %223 : vector<1x1x32xf32> to vector<1x32xf32>
    %c1_103 = arith.constant 1 : index
    %c0_104 = arith.constant 0 : index
    %c0_105 = arith.constant 0 : index
    %225 = vector.load %arg10[%c1_103, %c0_104, %c0_105] : memref<2x1x32xf32, #tpu.memory_space<vmem>>, vector<1x1x32xf32>
    %226 = vector.shape_cast %225 : vector<1x1x32xf32> to vector<1x32xf32>
    %cst_106 = arith.constant dense<0.000000e+00> : vector<16xf32>
    %227 = vector.multi_reduction <add>, %222, %cst_106 [1] : vector<16x32xf32> to vector<16xf32>
    %228 = vector.shape_cast %227 : vector<16xf32> to vector<16x1xf32>
    %cst_107 = arith.constant 3.200000e+01 : f32
    %229 = vector.broadcast %cst_107 : f32 to vector<16x1xf32>
    %230 = arith.divf %228, %229 : vector<16x1xf32>
    %231 = vector.broadcast %230 : vector<16x1xf32> to vector<16x32xf32>
    %232 = arith.subf %222, %231 : vector<16x32xf32>
    %233 = arith.mulf %232, %232 : vector<16x32xf32>
    %cst_108 = arith.constant dense<0.000000e+00> : vector<16xf32>
    %234 = vector.multi_reduction <add>, %233, %cst_108 [1] : vector<16x32xf32> to vector<16xf32>
    %235 = vector.shape_cast %234 : vector<16xf32> to vector<16x1xf32>
    %cst_109 = arith.constant 3.200000e+01 : f32
    %236 = vector.broadcast %cst_109 : f32 to vector<16x1xf32>
    %237 = arith.divf %235, %236 : vector<16x1xf32>
    %cst_110 = arith.constant 9.99999974E-6 : f32
    %238 = vector.broadcast %cst_110 : f32 to vector<16x1xf32>
    %239 = arith.addf %237, %238 : vector<16x1xf32>
    %240 = math.rsqrt %239 : vector<16x1xf32>
    %241 = vector.broadcast %240 : vector<16x1xf32> to vector<16x32xf32>
    %242 = arith.mulf %232, %241 : vector<16x32xf32>
    %243 = vector.broadcast %224 : vector<1x32xf32> to vector<16x32xf32>
    %244 = arith.mulf %242, %243 : vector<16x32xf32>
    %245 = vector.broadcast %226 : vector<1x32xf32> to vector<16x32xf32>
    %246 = arith.addf %244, %245 : vector<16x32xf32>
    %c1_111 = arith.constant 1 : index
    %c0_112 = arith.constant 0 : index
    %c0_113 = arith.constant 0 : index
    %247 = vector.load %arg11[%c1_111, %c0_112, %c0_113] : memref<2x32x128xf32, #tpu.memory_space<vmem>>, vector<1x32x128xf32>
    %248 = vector.shape_cast %247 : vector<1x32x128xf32> to vector<32x128xf32>
    %cst_114 = arith.constant dense<0.000000e+00> : vector<16x128xf32>
    %249 = tpu.matmul %246, %248, %cst_114 {dimension_numbers = #tpu.dot_dimension_numbers<[1], [0], [0], [1], [0, 0, 1, 1], [], []>} : vector<16x32xf32>, vector<32x128xf32>, vector<16x128xf32> -> vector<16x128xf32>
    %c1_115 = arith.constant 1 : index
    %c0_116 = arith.constant 0 : index
    %c0_117 = arith.constant 0 : index
    %250 = vector.load %arg12[%c1_115, %c0_116, %c0_117] : memref<2x1x128xf32, #tpu.memory_space<vmem>>, vector<1x1x128xf32>
    %251 = vector.shape_cast %250 : vector<1x1x128xf32> to vector<1x128xf32>
    %252 = vector.broadcast %251 : vector<1x128xf32> to vector<16x128xf32>
    %253 = arith.addf %249, %252 : vector<16x128xf32>
    %cst_118 = arith.constant 0.000000e+00 : f32
    %254 = vector.broadcast %cst_118 : f32 to vector<16x128xf32>
    %255 = arith.maximumf %253, %254 : vector<16x128xf32>
    %c1_119 = arith.constant 1 : index
    %c0_120 = arith.constant 0 : index
    %c0_121 = arith.constant 0 : index
    %256 = vector.load %arg13[%c1_119, %c0_120, %c0_121] : memref<2x128x32xf32, #tpu.memory_space<vmem>>, vector<1x128x32xf32>
    %257 = vector.shape_cast %256 : vector<1x128x32xf32> to vector<128x32xf32>
    %cst_122 = arith.constant dense<0.000000e+00> : vector<16x32xf32>
    %258 = tpu.matmul %255, %257, %cst_122 {dimension_numbers = #tpu.dot_dimension_numbers<[1], [0], [0], [1], [0, 0, 1, 1], [], []>} : vector<16x128xf32>, vector<128x32xf32>, vector<16x32xf32> -> vector<16x32xf32>
    %c1_123 = arith.constant 1 : index
    %c0_124 = arith.constant 0 : index
    %c0_125 = arith.constant 0 : index
    %259 = vector.load %arg14[%c1_123, %c0_124, %c0_125] : memref<2x1x32xf32, #tpu.memory_space<vmem>>, vector<1x1x32xf32>
    %260 = vector.shape_cast %259 : vector<1x1x32xf32> to vector<1x32xf32>
    %261 = vector.broadcast %260 : vector<1x32xf32> to vector<16x32xf32>
    %262 = arith.addf %258, %261 : vector<16x32xf32>
    %263 = arith.addf %222, %262 : vector<16x32xf32>
    %264 = tpu.concatenate %64, %86, %189, %211 in 1 : vector<16x8xf32>, vector<16x8xf32>, vector<16x8xf32>, vector<16x8xf32> -> vector<16x32xf32>
    %c0_126 = arith.constant 0 : index
    %c0_127 = arith.constant 0 : index
    %265 = vector.load %arg22[%c0_126, %c0_127] : memref<16x32xf32, #tpu.memory_space<vmem>>, vector<16x32xf32>
    tpu.vector_store %arg22[%c0_126, %c0_127], %264 {strides = array<i32>} : memref<16x32xf32, #tpu.memory_space<vmem>>, vector<16x32xf32>,
    %c0_128 = arith.constant 0 : index
    %c0_129 = arith.constant 0 : index
    %266 = vector.load %arg15[%c0_128, %c0_129] : memref<1x32xf32, #tpu.memory_space<vmem>>, vector<1x32xf32>
    %c0_130 = arith.constant 0 : index
    %c0_131 = arith.constant 0 : index
    %267 = vector.load %arg16[%c0_130, %c0_131] : memref<1x32xf32, #tpu.memory_space<vmem>>, vector<1x32xf32>
    %cst_132 = arith.constant dense<0.000000e+00> : vector<16xf32>
    %268 = vector.multi_reduction <add>, %263, %cst_132 [1] : vector<16x32xf32> to vector<16xf32>
    %269 = vector.shape_cast %268 : vector<16xf32> to vector<16x1xf32>
    %cst_133 = arith.constant 3.200000e+01 : f32
    %270 = vector.broadcast %cst_133 : f32 to vector<16x1xf32>
    %271 = arith.divf %269, %270 : vector<16x1xf32>
    %272 = vector.broadcast %271 : vector<16x1xf32> to vector<16x32xf32>
    %273 = arith.subf %263, %272 : vector<16x32xf32>
    %274 = arith.mulf %273, %273 : vector<16x32xf32>
    %cst_134 = arith.constant dense<0.000000e+00> : vector<16xf32>
    %275 = vector.multi_reduction <add>, %274, %cst_134 [1] : vector<16x32xf32> to vector<16xf32>
    %276 = vector.shape_cast %275 : vector<16xf32> to vector<16x1xf32>
    %cst_135 = arith.constant 3.200000e+01 : f32
    %277 = vector.broadcast %cst_135 : f32 to vector<16x1xf32>
    %278 = arith.divf %276, %277 : vector<16x1xf32>
    %cst_136 = arith.constant 9.99999974E-6 : f32
    %279 = vector.broadcast %cst_136 : f32 to vector<16x1xf32>
    %280 = arith.addf %278, %279 : vector<16x1xf32>
    %281 = math.rsqrt %280 : vector<16x1xf32>
    %282 = vector.broadcast %281 : vector<16x1xf32> to vector<16x32xf32>
    %283 = arith.mulf %273, %282 : vector<16x32xf32>
    %284 = vector.broadcast %266 : vector<1x32xf32> to vector<16x32xf32>
    %285 = arith.mulf %283, %284 : vector<16x32xf32>
    %286 = vector.broadcast %267 : vector<1x32xf32> to vector<16x32xf32>
    %287 = arith.addf %285, %286 : vector<16x32xf32>
    %288 = tpu.iota {dimensions = array<i32: 0>} : vector<2x16xi32>
    %289 = tpu.iota {dimensions = array<i32: 1>} : vector<2x16xi32>
    %c8_i32 = arith.constant 8 : i32
    %290 = vector.broadcast %c8_i32 : i32 to vector<2x16xi32>
    %291 = arith.muli %288, %290 : vector<2x16xi32>
    %292 = arith.cmpi sge, %289, %291 : vector<2x16xi32>
    %c1_i32 = arith.constant 1 : i32
    %293 = vector.broadcast %c1_i32 : i32 to vector<2x16xi32>
    %294 = arith.addi %288, %293 : vector<2x16xi32>
    %c8_i32_137 = arith.constant 8 : i32
    %295 = vector.broadcast %c8_i32_137 : i32 to vector<2x16xi32>
    %296 = arith.muli %294, %295 : vector<2x16xi32>
    %297 = arith.cmpi slt, %289, %296 : vector<2x16xi32>
    %298 = arith.andi %292, %297 : vector<2x16xi1>
    %299 = arith.extui %298 : vector<2x16xi1> to vector<2x16xi32>
    %300 = arith.sitofp %299 : vector<2x16xi32> to vector<2x16xf32>
    %cst_138 = arith.constant 1.250000e-01 : f32
    %301 = vector.broadcast %cst_138 : f32 to vector<2x16xf32>
    %302 = arith.mulf %300, %301 : vector<2x16xf32>
    %cst_139 = arith.constant dense<0.000000e+00> : vector<2x32xf32>
    %303 = tpu.matmul %302, %287, %cst_139 {dimension_numbers = #tpu.dot_dimension_numbers<[1], [0], [0], [1], [0, 0, 1, 1], [], []>} : vector<2x16xf32>, vector<16x32xf32>, vector<2x32xf32> -> vector<2x32xf32>
    %c0_140 = arith.constant 0 : index
    %c0_141 = arith.constant 0 : index
    %304 = vector.load %arg17[%c0_140, %c0_141] : memref<32x32xf32, #tpu.memory_space<vmem>>, vector<32x32xf32>
    %cst_142 = arith.constant dense<0.000000e+00> : vector<2x32xf32>
    %305 = tpu.matmul %303, %304, %cst_142 {dimension_numbers = #tpu.dot_dimension_numbers<[1], [0], [0], [1], [0, 0, 1, 1], [], []>} : vector<2x32xf32>, vector<32x32xf32>, vector<2x32xf32> -> vector<2x32xf32>
    %c0_143 = arith.constant 0 : index
    %c0_144 = arith.constant 0 : index
    %306 = vector.load %arg18[%c0_143, %c0_144] : memref<1x32xf32, #tpu.memory_space<vmem>>, vector<1x32xf32>
    %307 = vector.broadcast %306 : vector<1x32xf32> to vector<2x32xf32>
    %308 = arith.addf %305, %307 : vector<2x32xf32>
    %cst_145 = arith.constant 0.000000e+00 : f32
    %309 = vector.broadcast %cst_145 : f32 to vector<2x32xf32>
    %310 = arith.maximumf %308, %309 : vector<2x32xf32>
    %c0_146 = arith.constant 0 : index
    %c0_147 = arith.constant 0 : index
    %311 = vector.load %arg19[%c0_146, %c0_147] : memref<32x3xf32, #tpu.memory_space<vmem>>, vector<32x3xf32>
    %cst_148 = arith.constant dense<0.000000e+00> : vector<2x3xf32>
    %312 = tpu.matmul %310, %311, %cst_148 {dimension_numbers = #tpu.dot_dimension_numbers<[1], [0], [0], [1], [0, 0, 1, 1], [], []>} : vector<2x32xf32>, vector<32x3xf32>, vector<2x3xf32> -> vector<2x3xf32>
    %c0_149 = arith.constant 0 : index
    %c0_150 = arith.constant 0 : index
    %313 = vector.load %arg20[%c0_149, %c0_150] : memref<1x3xf32, #tpu.memory_space<vmem>>, vector<1x3xf32>
    %314 = vector.broadcast %313 : vector<1x3xf32> to vector<2x3xf32>
    %315 = arith.addf %312, %314 : vector<2x3xf32>
    %cst_151 = arith.constant dense<0xFF800000> : vector<2xf32>
    %316 = vector.multi_reduction <maximumf>, %315, %cst_151 [1] : vector<2x3xf32> to vector<2xf32>
    %317 = vector.shape_cast %316 : vector<2xf32> to vector<2x1xf32>
    %318 = vector.broadcast %317 : vector<2x1xf32> to vector<2x3xf32>
    %319 = arith.subf %315, %318 : vector<2x3xf32>
    %320 = math.exp %319 : vector<2x3xf32>
    %cst_152 = arith.constant dense<0.000000e+00> : vector<2xf32>
    %321 = vector.multi_reduction <add>, %320, %cst_152 [1] : vector<2x3xf32> to vector<2xf32>
    %322 = vector.shape_cast %321 : vector<2xf32> to vector<2x1xf32>
    %323 = math.log %322 : vector<2x1xf32>
    %324 = vector.broadcast %323 : vector<2x1xf32> to vector<2x3xf32>
    %325 = arith.subf %319, %324 : vector<2x3xf32>
    %c0_153 = arith.constant 0 : index
    %c0_154 = arith.constant 0 : index
    %326 = vector.load %arg21[%c0_153, %c0_154] : memref<2x3xf32, #tpu.memory_space<vmem>>, vector<2x3xf32>
    tpu.vector_store %arg21[%c0_153, %c0_154], %325 {strides = array<i32>} : memref<2x3xf32, #tpu.memory_space<vmem>>, vector<2x3xf32>,
    return
  }
}

</mosaic_0001>

<llo_original>
// kernel: nn1dan_forward.1
$region0: #{nn1dan_forward.1}
  #allocation0 [shape = 'u32[]', space=smem, size = 0x4, offset = 0x4, fixed_abs, tag = 'smem constant byte address 0x4 - core index']
  #allocation1 [shape = 'u32[72,128]{1,0:T(1,128)}', space=vmem, size = 0x9000, scoped, tag = 'internal scratch']
  %s0 = inlined_call_operand.vmem [shape: s32[1,16], index: 0, kind: input, shape index: {}]
  %s1 = inlined_call_operand.vmem [shape: f32[64,32], index: 1, kind: input, shape index: {}]
  %s2 = inlined_call_operand.vmem [shape: f32[8,32], index: 2, kind: input, shape index: {}]
  %s3 = inlined_call_operand.vmem [shape: f32[2,1,32], index: 3, kind: input, shape index: {}]
  %s4 = inlined_call_operand.vmem [shape: f32[2,1,32], index: 4, kind: input, shape index: {}]
  %s5 = inlined_call_operand.vmem [shape: f32[2,32,96], index: 5, kind: input, shape index: {}]
  %s6 = inlined_call_operand.vmem [shape: f32[2,1,96], index: 6, kind: input, shape index: {}]
  %s7 = inlined_call_operand.vmem [shape: f32[2,32,32], index: 7, kind: input, shape index: {}]
  %s8 = inlined_call_operand.vmem [shape: f32[2,1,32], index: 8, kind: input, shape index: {}]
  %s9 = inlined_call_operand.vmem [shape: f32[2,1,32], index: 9, kind: input, shape index: {}]
  %s10 = inlined_call_operand.vmem [shape: f32[2,1,32], index: 10, kind: input, shape index: {}]
  %s11 = inlined_call_operand.vmem [shape: f32[2,32,128], index: 11, kind: input, shape index: {}]
  %s12 = inlined_call_operand.vmem [shape: f32[2,1,128], index: 12, kind: input, shape index: {}]
  %s13 = inlined_call_operand.vmem [shape: f32[2,128,32], index: 13, kind: input, shape index: {}]
  %s14 = inlined_call_operand.vmem [shape: f32[2,1,32], index: 14, kind: input, shape index: {}]
  %s15 = inlined_call_operand.vmem [shape: f32[1,32], index: 15, kind: input, shape index: {}]
  %s16 = inlined_call_operand.vmem [shape: f32[1,32], index: 16, kind: input, shape index: {}]
  %s17 = inlined_call_operand.vmem [shape: f32[32,32], index: 17, kind: input, shape index: {}]
  %s18 = inlined_call_operand.vmem [shape: f32[1,32], index: 18, kind: input, shape index: {}]
  %s19 = inlined_call_operand.vmem [shape: f32[32,3], index: 19, kind: input, shape index: {}]
  %s20 = inlined_call_operand.vmem [shape: f32[1,3], index: 20, kind: input, shape index: {}]
  %s21 = inlined_call_operand.hbm [shape: f32[2,3], index: 21, kind: output, shape index: {0}]
  %s22 = inlined_call_operand.vmem [shape: f32[16,32], index: 22, kind: output, shape index: {1}]
  %23 = xla_tuple %s21, %s22
  %s24 = sld [smem:[#allocation0]]
  $region102: #{nn1dan_forward.1} parent=0
    _
  %s26 = ssub.s32 1, %s24
  %s27 = scalar_select 0, %s26, %s24
  $region1: #{nn1dan_forward.1} parent=0
    #allocation2 [shape = 'u8[1024]{0}', space=vmem, size = 0x400, scoped, tag = 'output window, operand 0, single buffered']
    #allocation3 [shape = 's32[1]{0}', space=sflag, size = 0x4, scoped, tag = 'scoped memory for nn1dan_forward.1']
    %28 = vsyncpa [#allocation3], 0
    // Predicated region
    $region2: #{nn1dan_forward.1} parent=1 // pred_check
      _
    $region3: #{nn1dan_forward.1} parent=1 // pred_check_branch
      %30 = sbr.rel (0) target = $region5
    $region4: #{nn1dan_forward.1} parent=1 // pred_region
      _
    $region5: #{nn1dan_forward.1} parent=1 // pred_fallthru
      _
    // Predicated region
    $region6: #{nn1dan_forward.1} parent=1 // pred_check
      _
    $region7: #{nn1dan_forward.1} parent=1 // pred_check_branch
      %32 = sbr.rel (0) target = $region9
    $region8: #{nn1dan_forward.1} parent=1 // pred_region
      _
    $region9: #{nn1dan_forward.1} parent=1 // pred_fallthru
      _
    // Predicated region
    $region10: #{nn1dan_forward.1} parent=1 // pred_check
      _
    $region11: #{nn1dan_forward.1} parent=1 // pred_check_branch
      %34 = sbr.rel (0) target = $region13
    $region12: #{nn1dan_forward.1} parent=1 // pred_region
      _
    $region13: #{nn1dan_forward.1} parent=1 // pred_fallthru
      _
    // Predicated region
    $region14: #{nn1dan_forward.1} parent=1 // pred_check
      _
    $region15: #{nn1dan_forward.1} parent=1 // pred_check_branch
      %36 = sbr.rel (0) target = $region17
    $region16: #{nn1dan_forward.1} parent=1 // pred_region
      _
    $region17: #{nn1dan_forward.1} parent=1 // pred_fallthru
      _
    // Predicated region
    $region18: #{nn1dan_forward.1} parent=1 // pred_check
      _
    $region19: #{nn1dan_forward.1} parent=1 // pred_check_branch
      %38 = sbr.rel (0) target = $region21
    $region20: #{nn1dan_forward.1} parent=1 // pred_region
      _
    $region21: #{nn1dan_forward.1} parent=1 // pred_fallthru
      _
    // Predicated region
    $region22: #{nn1dan_forward.1} parent=1 // pred_check
      _
    $region23: #{nn1dan_forward.1} parent=1 // pred_check_branch
      %40 = sbr.rel (0) target = $region25
    $region24: #{nn1dan_forward.1} parent=1 // pred_region
      _
    $region25: #{nn1dan_forward.1} parent=1 // pred_fallthru
      _
    // Predicated region
    $region26: #{nn1dan_forward.1} parent=1 // pred_check
      _
    $region27: #{nn1dan_forward.1} parent=1 // pred_check_branch
      %42 = sbr.rel (0) target = $region29
    $region28: #{nn1dan_forward.1} parent=1 // pred_region
      _
    $region29: #{nn1dan_forward.1} parent=1 // pred_fallthru
      _
    // Predicated region
    $region30: #{nn1dan_forward.1} parent=1 // pred_check
      _
    $region31: #{nn1dan_forward.1} parent=1 // pred_check_branch
      %44 = sbr.rel (0) target = $region33
    $region32: #{nn1dan_forward.1} parent=1 // pred_region
      _
    $region33: #{nn1dan_forward.1} parent=1 // pred_fallthru
      _
    // Predicated region
    $region34: #{nn1dan_forward.1} parent=1 // pred_check
      _
    $region35: #{nn1dan_forward.1} parent=1 // pred_check_branch
      %46 = sbr.rel (0) target = $region37
    $region36: #{nn1dan_forward.1} parent=1 // pred_region
      _
    $region37: #{nn1dan_forward.1} parent=1 // pred_fallthru
      _
    // Predicated region
    $region38: #{nn1dan_forward.1} parent=1 // pred_check
      _
    $region39: #{nn1dan_forward.1} parent=1 // pred_check_branch
      %48 = sbr.rel (0) target = $region41
    $region40: #{nn1dan_forward.1} parent=1 // pred_region
      _
    $region41: #{nn1dan_forward.1} parent=1 // pred_fallthru
      _
    // Predicated region
    $region42: #{nn1dan_forward.1} parent=1 // pred_check
      _
    $region43: #{nn1dan_forward.1} parent=1 // pred_check_branch
      %50 = sbr.rel (0) target = $region45
    $region44: #{nn1dan_forward.1} parent=1 // pred_region
      _
    $region45: #{nn1dan_forward.1} parent=1 // pred_fallthru
      _
    // Predicated region
    $region46: #{nn1dan_forward.1} parent=1 // pred_check
      _
    $region47: #{nn1dan_forward.1} parent=1 // pred_check_branch
      %52 = sbr.rel (0) target = $region49
    $region48: #{nn1dan_forward.1} parent=1 // pred_region
      _
    $region49: #{nn1dan_forward.1} parent=1 // pred_fallthru
      _
    // Predicated region
    $region50: #{nn1dan_forward.1} parent=1 // pred_check
      _
    $region51: #{nn1dan_forward.1} parent=1 // pred_check_branch
      %54 = sbr.rel (0) target = $region53
    $region52: #{nn1dan_forward.1} parent=1 // pred_region
      _
    $region53: #{nn1dan_forward.1} parent=1 // pred_fallthru
      _
    // Predicated region
    $region54: #{nn1dan_forward.1} parent=1 // pred_check
      _
    $region55: #{nn1dan_forward.1} parent=1 // pred_check_branch
      %56 = sbr.rel (0) target = $region57
    $region56: #{nn1dan_forward.1} parent=1 // pred_region
      _
    $region57: #{nn1dan_forward.1} parent=1 // pred_fallthru
      _
    // Predicated region
    $region58: #{nn1dan_forward.1} parent=1 // pred_check
      _
    $region59: #{nn1dan_forward.1} parent=1 // pred_check_branch
      %58 = sbr.rel (0) target = $region61
    $region60: #{nn1dan_forward.1} parent=1 // pred_region
      _
    $region61: #{nn1dan_forward.1} parent=1 // pred_fallthru
      _
    // Predicated region
    $region62: #{nn1dan_forward.1} parent=1 // pred_check
      _
    $region63: #{nn1dan_forward.1} parent=1 // pred_check_branch
      %60 = sbr.rel (0) target = $region65
    $region64: #{nn1dan_forward.1} parent=1 // pred_region
      _
    $region65: #{nn1dan_forward.1} parent=1 // pred_fallthru
      _
    // Predicated region
    $region66: #{nn1dan_forward.1} parent=1 // pred_check
      _
    $region67: #{nn1dan_forward.1} parent=1 // pred_check_branch
      %62 = sbr.rel (0) target = $region69
    $region68: #{nn1dan_forward.1} parent=1 // pred_region
      _
    $region69: #{nn1dan_forward.1} parent=1 // pred_fallthru
      _
    // Predicated region
    $region70: #{nn1dan_forward.1} parent=1 // pred_check
      _
    $region71: #{nn1dan_forward.1} parent=1 // pred_check_branch
      %64 = sbr.rel (0) target = $region73
    $region72: #{nn1dan_forward.1} parent=1 // pred_region
      _
    $region73: #{nn1dan_forward.1} parent=1 // pred_fallthru
      _
    // Predicated region
    $region74: #{nn1dan_forward.1} parent=1 // pred_check
      _
    $region75: #{nn1dan_forward.1} parent=1 // pred_check_branch
      %66 = sbr.rel (0) target = $region77
    $region76: #{nn1dan_forward.1} parent=1 // pred_region
      _
    $region77: #{nn1dan_forward.1} parent=1 // pred_fallthru
      _
    // Predicated region
    $region78: #{nn1dan_forward.1} parent=1 // pred_check
      _
    $region79: #{nn1dan_forward.1} parent=1 // pred_check_branch
      %68 = sbr.rel (0) target = $region81
    $region80: #{nn1dan_forward.1} parent=1 // pred_region
      _
    $region81: #{nn1dan_forward.1} parent=1 // pred_fallthru
      _
    // Predicated region
    $region82: #{nn1dan_forward.1} parent=1 // pred_check
      _
    $region83: #{nn1dan_forward.1} parent=1 // pred_check_branch
      %70 = sbr.rel (0) target = $region85
    $region84: #{nn1dan_forward.1} parent=1 // pred_region
      _
    $region85: #{nn1dan_forward.1} parent=1 // pred_fallthru
      _
    %v71 = vlaneseq
    %v72 = vshrl.u32 %v71, 7
    %v73 = vadd.s32 %v72, 8
    %v74 = vadd.s32 %v72, 16
    %v75 = vadd.s32 %v72, 24
    %v76 = vadd.s32 %v72, 32
    %v77 = vadd.s32 %v72, 40
    %v78 = vadd.s32 %v72, 48
    %v79 = vadd.s32 %v72, 56
    %v80 = vld [vmem:[%s0] sm:$0x1]
    %v81 = vperm.slane %v80, 0
    %vm82 = vcmp.eq.s32.totalorder %v81, %v72
    %vm83 = vcmp.eq.s32.totalorder %v81, %v73
    %vm84 = vcmp.eq.s32.totalorder %v81, %v74
    %vm85 = vcmp.eq.s32.totalorder %v81, %v75
    %vm86 = vcmp.eq.s32.totalorder %v81, %v76
    %vm87 = vcmp.eq.s32.totalorder %v81, %v77
    %vm88 = vcmp.eq.s32.totalorder %v81, %v78
    %vm89 = vcmp.eq.s32.totalorder %v81, %v79
    %v90 = vsel %vm82, 1, 0
    %v91 = vsel %vm83, 1, 0
    %v92 = vsel %vm84, 1, 0
    %v93 = vsel %vm85, 1, 0
    %v94 = vsel %vm86, 1, 0
    %v95 = vsel %vm87, 1, 0
    %v96 = vsel %vm88, 1, 0
    %v97 = vsel %vm89, 1, 0
    %v98 = vcvt.s32.f32 %v90
    %v99 = vcvt.s32.f32 %v91
    %v100 = vcvt.s32.f32 %v92
    %v101 = vcvt.s32.f32 %v93
    %v102 = vcvt.s32.f32 %v94
    %v103 = vcvt.s32.f32 %v95
    %v104 = vcvt.s32.f32 %v96
    %v105 = vcvt.s32.f32 %v97
    %v106 = vld [vmem:[%s1] sm:$0xff]
    %v107 = vld [vmem:[%s1 + $0x8] sm:$0xff]
    %v108 = vld [vmem:[%s1 + $0x10] sm:$0xff]
    %v109 = vld [vmem:[%s1 + $0x18] sm:$0xff]
    %v110 = vld [vmem:[%s1 + $0x20] sm:$0xff]
    %v111 = vld [vmem:[%s1 + $0x28] sm:$0xff]
    %v112 = vld [vmem:[%s1 + $0x30] sm:$0xff]
    %v113 = vld [vmem:[%s1 + $0x38] sm:$0xff]
    %114 = vxpose.xlu0.b32.start [1/16] %v98, 128
    %115 = vxpose.xlu0.b32.cont [2/16] %v99, 128
    %116 = vxpose.xlu0.b32.cont [3/16] %v100, 128
    %117 = vxpose.xlu0.b32.cont [4/16] %v101, 128
    %118 = vxpose.xlu0.b32.cont [5/16] %v102, 128
    %119 = vxpose.xlu0.b32.cont [6/16] %v103, 128
    %120 = vxpose.xlu0.b32.cont [7/16] %v104, 128
    %121 = vxpose.xlu0.b32.cont [8/16] %v105, 128
    %122 = vxpose.xlu0.b32.cont [9/16] 0.0, 128
    %123 = vxpose.xlu0.b32.cont [10/16] 0.0, 128
    %124 = vxpose.xlu0.b32.cont [11/16] 0.0, 128
    %125 = vxpose.xlu0.b32.cont [12/16] 0.0, 128
    %126 = vxpose.xlu0.b32.cont [13/16] 0.0, 128
    %127 = vxpose.xlu0.b32.cont [14/16] 0.0, 128
    %128 = vxpose.xlu0.b32.cont [15/16] 0.0, 128
    %129 = vxpose.xlu0.b32.end [16/16] 0.0, 128
    %v130 = vpop.trf.xlu0
    %v131 = vpop.trf.xlu0
    %v132 = vpop.trf.xlu0
    %v133 = vpop.trf.xlu0
    %v134 = vpop.trf.xlu0
    %v135 = vpop.trf.xlu0
    %v136 = vpop.trf.xlu0
    %v137 = vpop.trf.xlu0
    %v138 = vpop.trf.xlu0
    %v139 = vpop.trf.xlu0
    %v140 = vpop.trf.xlu0
    %v141 = vpop.trf.xlu0
    %v142 = vpop.trf.xlu0
    %v143 = vpop.trf.xlu0
    %v144 = vpop.trf.xlu0
    %v145 = vpop.trf.xlu0
    %vm146 = vcmask 523264
    %v148 = vsel %vm146, %v130, 0
    %v151 = vsel %vm146, %v131, 0
    %153 = vmatpush.msra.mxu0 0.0
    %154 = vmatpush.msra.mxu0 0.0
    %155 = vmatpush.msra.mxu0 0.0
    %156 = vmatpush.msra.mxu0 0.0
    %157 = vmatpush.msra.mxu0 0.0
    %158 = vmatpush.msra.mxu0 0.0
    %159 = vmatpush.msra.mxu0 0.0
    %160 = vmatpush.msra.mxu0 0.0
    %161 = vmatpush.msra.mxu0 %v113
    %162 = vmatpush.msra.mxu0 %v112
    %163 = vmatpush.msra.mxu0 %v111
    %164 = vmatpush.msra.mxu0 %v110
    %165 = vmatpush.msra.mxu0 %v109
    %166 = vmatpush.msra.mxu0 %v108
    %167 = vmatpush.msra.mxu0 %v107
    %168 = vmatpush.msra.mxu0 %v106
    %169 = vmatmul.f32.gmra.mxu0 %v148
    %v170 = vpop.f32.mrf.mxu0
    %v171 = vadd.f32 0.0, %v170
    %172 = vmatmul.f32.gmra.mxu0 %v151
    %v173 = vpop.f32.mrf.mxu0
    %v174 = vadd.f32 0.0, %v173
    %175 = vdwg.mxu0
    %v176 = vld [vmem:[%s2] sm:$0xff]
    %v177 = vadd.f32 %v171, %v176
    %v178 = vadd.f32 %v174, %v176
    %v179 = vld [vmem:[%s3] sm:$0x1]
    %v180 = vld [vmem:[%s4] sm:$0x1]
    %vm181 = vcmask 261120
    %v182 = vsel %vm181, %v177, 0.0
    %183 = vadd.xlane.f32.xlu0 %v182
    %v184 = vpop.xlane.xlu0 %183
    %v185 = vsel %vm181, %v178, 0.0
    %186 = vadd.xlane.f32.xlu0 %v185
    %v187 = vpop.xlane.xlu0 %186
    %v188 = vrcp.pop 32.0
    %v189 = vmul.f32 32.0, %v188
    %v190 = vsub.f32 1.0, %v189
    %v191 = vmul.f32 %v188, %v190
    %v192 = vadd.f32 %v188, %v191
    %vm193 = vweird.f32 %v188
    %v194 = vsel %vm193, %v188, %v192
    %v195 = vmul.f32 %v184, %v194
    %v196 = vmul.f32 %v187, %v194
    %v197 = vsub.f32 %v177, %v195
    %v198 = vsub.f32 %v178, %v196
    %v199 = vmul.f32 %v197, %v197
    %v200 = vmul.f32 %v198, %v198
    %v201 = vsel %vm181, %v199, 0.0
    %202 = vadd.xlane.f32.xlu0 %v201
    %v203 = vpop.xlane.xlu0 %202
    %v204 = vsel %vm181, %v200, 0.0
    %205 = vadd.xlane.f32.xlu0 %v204
    %v206 = vpop.xlane.xlu0 %205
    %v207 = vmul.f32 %v203, %v194
    %v208 = vmul.f32 %v206, %v194
    %v209 = vadd.f32 %v207, 1e-05
    %v210 = vadd.f32 %v208, 1e-05
    %v211 = vrsqrt.pop %v209
    %v212 = vmul.f32 %v211, %v209
    %v213 = vmul.f32 %v212, %v211
    %v214 = vmul.f32 0.5, %v213
    %v215 = vsub.f32 1.5, %v214
    %v216 = vmul.f32 %v211, %v215
    %vm217 = vweird.f32 %v209
    %vm218 = vweird.f32 %v211
    %vm219 = vmor %vm217, %vm218
    %v220 = vsel %vm219, %v211, %v216
    %v221 = vrsqrt.pop %v210
    %v222 = vmul.f32 %v221, %v210
    %v223 = vmul.f32 %v222, %v221
    %v224 = vmul.f32 0.5, %v223
    %v225 = vsub.f32 1.5, %v224
    %v226 = vmul.f32 %v221, %v225
    %vm227 = vweird.f32 %v210
    %vm228 = vweird.f32 %v221
    %vm229 = vmor %vm227, %vm228
    %v230 = vsel %vm229, %v221, %v226
    %v231 = vmul.f32 %v197, %v220
    %v232 = vmul.f32 %v198, %v230
    %v234 = vperm.slane %v179, 0
    %v236 = vmul.f32 %v231, %v234
    %v237 = vmul.f32 %v232, %v234
    %v239 = vperm.slane %v180, 0
    %v241 = vadd.f32 %v236, %v239
    %v242 = vadd.f32 %v237, %v239
    %v243 = vld [vmem:[%s5] sm:$0xff]
    %v244 = vld [vmem:[%s5 + $0x8] sm:$0xff]
    %v245 = vld [vmem:[%s5 + $0x10] sm:$0xff]
    %v246 = vld [vmem:[%s5 + $0x18] sm:$0xff]
    %v247 = vld [vmem:[%s6] sm:$0x1]
    %v249 = vperm.slane %v247, 0
    %v252 = vsel %vm181, %v241, 0
    %v255 = vsel %vm181, %v242, 0
    %257 = vmatpush.msra.mxu0 0.0
    %258 = vmatpush.msra.mxu0 0.0
    %259 = vmatpush.msra.mxu0 0.0
    %260 = vmatpush.msra.mxu0 0.0
    %261 = vmatpush.msra.mxu0 0.0
    %262 = vmatpush.msra.mxu0 0.0
    %263 = vmatpush.msra.mxu0 0.0
    %264 = vmatpush.msra.mxu0 0.0
    %265 = vmatpush.msra.mxu0 0.0
    %266 = vmatpush.msra.mxu0 0.0
    %267 = vmatpush.msra.mxu0 0.0
    %268 = vmatpush.msra.mxu0 0.0
    %269 = vmatpush.msra.mxu0 %v246
    %270 = vmatpush.msra.mxu0 %v245
    %271 = vmatpush.msra.mxu0 %v244
    %272 = vmatpush.msra.mxu0 %v243
    %273 = vmatmul.f32.gmra.mxu0 %v252
    %v274 = vpop.f32.mrf.mxu0
    %v275 = vadd.f32 %v249, %v274
    %276 = vmatmul.f32.gmra.mxu0 %v255
    %v277 = vpop.f32.mrf.mxu0
    %v278 = vadd.f32 %v249, %v277
    %279 = vdwg.mxu0
    %281 = vrot.lane.b32.xlu0 %v275, 96
    %v282 = vpop.permute.xlu0 %281
    %vm283 = vcmask 130048
    %v284 = vsel %vm283, %v275, 0
    %v286 = vsel %vm283, %v282, 0
    %288 = vmatpush.xpose.msra.mxu0 0.0
    %289 = vmatpush.xpose.msra.mxu0 0.0
    %290 = vmatpush.xpose.msra.mxu0 0.0
    %291 = vmatpush.xpose.msra.mxu0 0.0
    %292 = vmatpush.xpose.msra.mxu0 0.0
    %293 = vmatpush.xpose.msra.mxu0 0.0
    %294 = vmatpush.xpose.msra.mxu0 0.0
    %295 = vmatpush.xpose.msra.mxu0 0.0
    %296 = vmatpush.xpose.msra.mxu0 0.0
    %297 = vmatpush.xpose.msra.mxu0 0.0
    %298 = vmatpush.xpose.msra.mxu0 0.0
    %299 = vmatpush.xpose.msra.mxu0 0.0
    %300 = vmatpush.xpose.msra.mxu0 0.0
    %301 = vmatpush.xpose.msra.mxu0 0.0
    %302 = vmatpush.xpose.msra.mxu0 0.0
    %303 = vmatpush.xpose.msra.mxu0 %v286
    %304 = vmatmul.f32.gmra.mxu0 %v284
    %v305 = vpop.f32.mrf.mxu0
    %v306 = vadd.f32 0.0, %v305
    %307 = vdwg.mxu0
    %309 = vrot.lane.b32.xlu0 %v278, 96
    %v310 = vpop.permute.xlu0 %309
    %v311 = vsel %vm283, %v278, 0
    %v313 = vsel %vm283, %v310, 0
    %315 = vmatpush.xpose.msra.mxu0 0.0
    %316 = vmatpush.xpose.msra.mxu0 0.0
    %317 = vmatpush.xpose.msra.mxu0 0.0
    %318 = vmatpush.xpose.msra.mxu0 0.0
    %319 = vmatpush.xpose.msra.mxu0 0.0
    %320 = vmatpush.xpose.msra.mxu0 0.0
    %321 = vmatpush.xpose.msra.mxu0 0.0
    %322 = vmatpush.xpose.msra.mxu0 0.0
    %323 = vmatpush.xpose.msra.mxu0 0.0
    %324 = vmatpush.xpose.msra.mxu0 0.0
    %325 = vmatpush.xpose.msra.mxu0 0.0
    %326 = vmatpush.xpose.msra.mxu0 0.0
    %327 = vmatpush.xpose.msra.mxu0 0.0
    %328 = vmatpush.xpose.msra.mxu0 0.0
    %329 = vmatpush.xpose.msra.mxu0 0.0
    %330 = vmatpush.xpose.msra.mxu0 %v313
    %331 = vmatmul.f32.gmra.mxu0 %v311
    %v332 = vpop.f32.mrf.mxu0
    %v333 = vadd.f32 0.0, %v332
    %334 = vdwg.mxu0
    %v335 = vmul.f32 %v306, 0.25
    %v336 = vmul.f32 %v333, 0.25
    %vm337 = vcmask 64512
    %v338 = vsel %vm337, %v335, -inf
    %339 = vmax.xlane.f32.xlu0 %v338
    %v340 = vpop.xlane.xlu0 %339
    %v341 = vsel %vm337, %v336, -inf
    %342 = vmax.xlane.f32.xlu0 %v341
    %v343 = vpop.xlane.xlu0 %342
    %v344 = vsub.f32 %v335, %v340
    %v345 = vsub.f32 %v336, %v343
    %v346 = vmul.f32 %v344, 1.442695
    %v347 = vpow.pop %v346
    %v348 = vmul.f32 %v345, 1.442695
    %v349 = vpow.pop %v348
    %v350 = vsel %vm337, %v347, 0.0
    %351 = vadd.xlane.f32.xlu0 %v350
    %v352 = vpop.xlane.xlu0 %351
    %v353 = vsel %vm337, %v349, 0.0
    %354 = vadd.xlane.f32.xlu0 %v353
    %v355 = vpop.xlane.xlu0 %354
    %v356 = vrcp.pop %v352
    %v357 = vrcp.pop %v355
    %v358 = vmul.f32 %v347, %v356
    %v359 = vmul.f32 %v349, %v357
    %360 = vrot.lane.b32.xlu0 %v275, 64
    %v361 = vpop.permute.xlu0 %360
    %v364 = vsel %vm337, %v358, 0
    %366 = vmatpush.msra.mxu0 0.0
    %367 = vmatpush.msra.mxu0 0.0
    %368 = vmatpush.msra.mxu0 0.0
    %369 = vmatpush.msra.mxu0 0.0
    %370 = vmatpush.msra.mxu0 0.0
    %371 = vmatpush.msra.mxu0 0.0
    %372 = vmatpush.msra.mxu0 0.0
    %373 = vmatpush.msra.mxu0 0.0
    %374 = vmatpush.msra.mxu0 0.0
    %375 = vmatpush.msra.mxu0 0.0
    %376 = vmatpush.msra.mxu0 0.0
    %377 = vmatpush.msra.mxu0 0.0
    %378 = vmatpush.msra.mxu0 0.0
    %379 = vmatpush.msra.mxu0 0.0
    %380 = vmatpush.msra.mxu0 0.0
    %381 = vmatpush.msra.mxu0 %v361
    %382 = vmatmul.f32.gmra.mxu0 %v364
    %v383 = vpop.f32.mrf.mxu0
    %v384 = vadd.f32 0.0, %v383
    %385 = vdwg.mxu0
    %386 = vrot.lane.b32.xlu0 %v278, 64
    %v387 = vpop.permute.xlu0 %386
    %v390 = vsel %vm337, %v359, 0
    %392 = vmatpush.msra.mxu0 0.0
    %393 = vmatpush.msra.mxu0 0.0
    %394 = vmatpush.msra.mxu0 0.0
    %395 = vmatpush.msra.mxu0 0.0
    %396 = vmatpush.msra.mxu0 0.0
    %397 = vmatpush.msra.mxu0 0.0
    %398 = vmatpush.msra.mxu0 0.0
    %399 = vmatpush.msra.mxu0 0.0
    %400 = vmatpush.msra.mxu0 0.0
    %401 = vmatpush.msra.mxu0 0.0
    %402 = vmatpush.msra.mxu0 0.0
    %403 = vmatpush.msra.mxu0 0.0
    %404 = vmatpush.msra.mxu0 0.0
    %405 = vmatpush.msra.mxu0 0.0
    %406 = vmatpush.msra.mxu0 0.0
    %407 = vmatpush.msra.mxu0 %v387
    %408 = vmatmul.f32.gmra.mxu0 %v390
    %v409 = vpop.f32.mrf.mxu0
    %v410 = vadd.f32 0.0, %v409
    %411 = vdwg.mxu0
    %412 = vrot.lane.b32.xlu0 %v275, 112
    %v413 = vpop.permute.xlu0 %412
    %414 = vrot.lane.b32.xlu0 %v275, 80
    %v415 = vpop.permute.xlu0 %414
    %v416 = vsel %vm283, %v413, 0
    %v418 = vsel %vm283, %v415, 0
    %420 = vmatpush.xpose.msra.mxu0 0.0
    %421 = vmatpush.xpose.msra.mxu0 0.0
    %422 = vmatpush.xpose.msra.mxu0 0.0
    %423 = vmatpush.xpose.msra.mxu0 0.0
    %424 = vmatpush.xpose.msra.mxu0 0.0
    %425 = vmatpush.xpose.msra.mxu0 0.0
    %426 = vmatpush.xpose.msra.mxu0 0.0
    %427 = vmatpush.xpose.msra.mxu0 0.0
    %428 = vmatpush.xpose.msra.mxu0 0.0
    %429 = vmatpush.xpose.msra.mxu0 0.0
    %430 = vmatpush.xpose.msra.mxu0 0.0
    %431 = vmatpush.xpose.msra.mxu0 0.0
    %432 = vmatpush.xpose.msra.mxu0 0.0
    %433 = vmatpush.xpose.msra.mxu0 0.0
    %434 = vmatpush.xpose.msra.mxu0 0.0
    %435 = vmatpush.xpose.msra.mxu0 %v418
    %436 = vmatmul.f32.gmra.mxu0 %v416
    %v437 = vpop.f32.mrf.mxu0
    %v438 = vadd.f32 0.0, %v437
    %439 = vdwg.mxu0
    %440 = vrot.lane.b32.xlu0 %v278, 112
    %v441 = vpop.permute.xlu0 %440
    %442 = vrot.lane.b32.xlu0 %v278, 80
    %v443 = vpop.permute.xlu0 %442
    %v444 = vsel %vm283, %v441, 0
    %v446 = vsel %vm283, %v443, 0
    %448 = vmatpush.xpose.msra.mxu0 0.0
    %449 = vmatpush.xpose.msra.mxu0 0.0
    %450 = vmatpush.xpose.msra.mxu0 0.0
    %451 = vmatpush.xpose.msra.mxu0 0.0
    %452 = vmatpush.xpose.msra.mxu0 0.0
    %453 = vmatpush.xpose.msra.mxu0 0.0
    %454 = vmatpush.xpose.msra.mxu0 0.0
    %455 = vmatpush.xpose.msra.mxu0 0.0
    %456 = vmatpush.xpose.msra.mxu0 0.0
    %457 = vmatpush.xpose.msra.mxu0 0.0
    %458 = vmatpush.xpose.msra.mxu0 0.0
    %459 = vmatpush.xpose.msra.mxu0 0.0
    %460 = vmatpush.xpose.msra.mxu0 0.0
    %461 = vmatpush.xpose.msra.mxu0 0.0
    %462 = vmatpush.xpose.msra.mxu0 0.0
    %463 = vmatpush.xpose.msra.mxu0 %v446
    %464 = vmatmul.f32.gmra.mxu0 %v444
    %v465 = vpop.f32.mrf.mxu0
    %v466 = vadd.f32 0.0, %v465
    %467 = vdwg.mxu0
    %v468 = vmul.f32 %v438, 0.25
    %v469 = vmul.f32 %v466, 0.25
    %v470 = vsel %vm337, %v468, -inf
    %471 = vmax.xlane.f32.xlu0 %v470
    %v472 = vpop.xlane.xlu0 %471
    %v473 = vsel %vm337, %v469, -inf
    %474 = vmax.xlane.f32.xlu0 %v473
    %v475 = vpop.xlane.xlu0 %474
    %v476 = vsub.f32 %v468, %v472
    %v477 = vsub.f32 %v469, %v475
    %v478 = vmul.f32 %v476, 1.442695
    %v479 = vpow.pop %v478
    %v480 = vmul.f32 %v477, 1.442695
    %v481 = vpow.pop %v480
    %v482 = vsel %vm337, %v479, 0.0
    %483 = vadd.xlane.f32.xlu0 %v482
    %v484 = vpop.xlane.xlu0 %483
    %v485 = vsel %vm337, %v481, 0.0
    %486 = vadd.xlane.f32.xlu0 %v485
    %v487 = vpop.xlane.xlu0 %486
    %v488 = vrcp.pop %v484
    %v489 = vrcp.pop %v487
    %v490 = vmul.f32 %v479, %v488
    %v491 = vmul.f32 %v481, %v489
    %492 = vrot.lane.b32.xlu0 %v275, 48
    %v493 = vpop.permute.xlu0 %492
    %v496 = vsel %vm337, %v490, 0
    %498 = vmatpush.msra.mxu0 0.0
    %499 = vmatpush.msra.mxu0 0.0
    %500 = vmatpush.msra.mxu0 0.0
    %501 = vmatpush.msra.mxu0 0.0
    %502 = vmatpush.msra.mxu0 0.0
    %503 = vmatpush.msra.mxu0 0.0
    %504 = vmatpush.msra.mxu0 0.0
    %505 = vmatpush.msra.mxu0 0.0
    %506 = vmatpush.msra.mxu0 0.0
    %507 = vmatpush.msra.mxu0 0.0
    %508 = vmatpush.msra.mxu0 0.0
    %509 = vmatpush.msra.mxu0 0.0
    %510 = vmatpush.msra.mxu0 0.0
    %511 = vmatpush.msra.mxu0 0.0
    %512 = vmatpush.msra.mxu0 0.0
    %513 = vmatpush.msra.mxu0 %v493
    %514 = vmatmul.f32.gmra.mxu0 %v496
    %v515 = vpop.f32.mrf.mxu0
    %v516 = vadd.f32 0.0, %v515
    %517 = vdwg.mxu0
    %518 = vrot.lane.b32.xlu0 %v278, 48
    %v519 = vpop.permute.xlu0 %518
    %v522 = vsel %vm337, %v491, 0
    %524 = vmatpush.msra.mxu0 0.0
    %525 = vmatpush.msra.mxu0 0.0
    %526 = vmatpush.msra.mxu0 0.0
    %527 = vmatpush.msra.mxu0 0.0
    %528 = vmatpush.msra.mxu0 0.0
    %529 = vmatpush.msra.mxu0 0.0
    %530 = vmatpush.msra.mxu0 0.0
    %531 = vmatpush.msra.mxu0 0.0
    %532 = vmatpush.msra.mxu0 0.0
    %533 = vmatpush.msra.mxu0 0.0
    %534 = vmatpush.msra.mxu0 0.0
    %535 = vmatpush.msra.mxu0 0.0
    %536 = vmatpush.msra.mxu0 0.0
    %537 = vmatpush.msra.mxu0 0.0
    %538 = vmatpush.msra.mxu0 0.0
    %539 = vmatpush.msra.mxu0 %v519
    %540 = vmatmul.f32.gmra.mxu0 %v522
    %v541 = vpop.f32.mrf.mxu0
    %v542 = vadd.f32 0.0, %v541
    %543 = vdwg.mxu0
    %546 = vrot.lane.b32.xlu0 %v516, 16
    %v547 = vpop.permute.xlu0 %546
    %548 = vrot.lane.b32.xlu0 %v542, 16
    %v549 = vpop.permute.xlu0 %548
    %v552 = vsel %vm283, %v384, %v547
    %v553 = vsel %vm283, %v410, %v549
    %v554 = vld [vmem:[%s7] sm:$0xff]
    %v555 = vld [vmem:[%s7 + $0x8] sm:$0xff]
    %v556 = vld [vmem:[%s7 + $0x10] sm:$0xff]
    %v557 = vld [vmem:[%s7 + $0x18] sm:$0xff]
    %v558 = vld [vmem:[%s8] sm:$0x1]
    %v560 = vperm.slane %v558, 0
    %v563 = vsel %vm181, %v552, 0
    %v566 = vsel %vm181, %v553, 0
    %568 = vmatpush.msra.mxu0 0.0
    %569 = vmatpush.msra.mxu0 0.0
    %570 = vmatpush.msra.mxu0 0.0
    %571 = vmatpush.msra.mxu0 0.0
    %572 = vmatpush.msra.mxu0 0.0
    %573 = vmatpush.msra.mxu0 0.0
    %574 = vmatpush.msra.mxu0 0.0
    %575 = vmatpush.msra.mxu0 0.0
    %576 = vmatpush.msra.mxu0 0.0
    %577 = vmatpush.msra.mxu0 0.0
    %578 = vmatpush.msra.mxu0 0.0
    %579 = vmatpush.msra.mxu0 0.0
    %580 = vmatpush.msra.mxu0 %v557
    %581 = vmatpush.msra.mxu0 %v556
    %582 = vmatpush.msra.mxu0 %v555
    %583 = vmatpush.msra.mxu0 %v554
    %584 = vmatmul.f32.gmra.mxu0 %v563
    %v585 = vpop.f32.mrf.mxu0
    %v586 = vadd.f32 %v560, %v585
    %587 = vmatmul.f32.gmra.mxu0 %v566
    %v588 = vpop.f32.mrf.mxu0
    %v589 = vadd.f32 %v560, %v588
    %590 = vdwg.mxu0
    %v591 = vadd.f32 %v177, %v586
    %v592 = vadd.f32 %v178, %v589
    %v593 = vld [vmem:[%s9] sm:$0x1]
    %v594 = vld [vmem:[%s10] sm:$0x1]
    %v595 = vsel %vm181, %v591, 0.0
    %596 = vadd.xlane.f32.xlu0 %v595
    %v597 = vpop.xlane.xlu0 %596
    %v598 = vsel %vm181, %v592, 0.0
    %599 = vadd.xlane.f32.xlu0 %v598
    %v600 = vpop.xlane.xlu0 %599
    %v601 = vmul.f32 %v597, %v194
    %v602 = vmul.f32 %v600, %v194
    %v603 = vsub.f32 %v591, %v601
    %v604 = vsub.f32 %v592, %v602
    %v605 = vmul.f32 %v603, %v603
    %v606 = vmul.f32 %v604, %v604
    %v607 = vsel %vm181, %v605, 0.0
    %608 = vadd.xlane.f32.xlu0 %v607
    %v609 = vpop.xlane.xlu0 %608
    %v610 = vsel %vm181, %v606, 0.0
    %611 = vadd.xlane.f32.xlu0 %v610
    %v612 = vpop.xlane.xlu0 %611
    %v613 = vmul.f32 %v609, %v194
    %v614 = vmul.f32 %v612, %v194
    %v615 = vadd.f32 %v613, 1e-05
    %v616 = vadd.f32 %v614, 1e-05
    %v617 = vrsqrt.pop %v615
    %v618 = vmul.f32 %v617, %v615
    %v619 = vmul.f32 %v618, %v617
    %v620 = vmul.f32 0.5, %v619
    %v621 = vsub.f32 1.5, %v620
    %v622 = vmul.f32 %v617, %v621
    %vm623 = vweird.f32 %v615
    %vm624 = vweird.f32 %v617
    %vm625 = vmor %vm623, %vm624
    %v626 = vsel %vm625, %v617, %v622
    %v627 = vrsqrt.pop %v616
    %v628 = vmul.f32 %v627, %v616
    %v629 = vmul.f32 %v628, %v627
    %v630 = vmul.f32 0.5, %v629
    %v631 = vsub.f32 1.5, %v630
    %v632 = vmul.f32 %v627, %v631
    %vm633 = vweird.f32 %v616
    %vm634 = vweird.f32 %v627
    %vm635 = vmor %vm633, %vm634
    %v636 = vsel %vm635, %v627, %v632
    %v637 = vmul.f32 %v603, %v626
    %v638 = vmul.f32 %v604, %v636
    %v640 = vperm.slane %v593, 0
    %v642 = vmul.f32 %v637, %v640
    %v643 = vmul.f32 %v638, %v640
    %v645 = vperm.slane %v594, 0
    %v647 = vadd.f32 %v642, %v645
    %v648 = vadd.f32 %v643, %v645
    %v649 = vld [vmem:[%s11] sm:$0xff]
    %v650 = vld [vmem:[%s11 + $0x8] sm:$0xff]
    %v651 = vld [vmem:[%s11 + $0x10] sm:$0xff]
    %v652 = vld [vmem:[%s11 + $0x18] sm:$0xff]
    %v653 = vld [vmem:[%s12] sm:$0x1]
    %v655 = vperm.slane %v653, 0
    %v658 = vsel %vm181, %v647, 0
    %v661 = vsel %vm181, %v648, 0
    %663 = vmatpush.msra.mxu0 0.0
    %664 = vmatpush.msra.mxu0 0.0
    %665 = vmatpush.msra.mxu0 0.0
    %666 = vmatpush.msra.mxu0 0.0
    %667 = vmatpush.msra.mxu0 0.0
    %668 = vmatpush.msra.mxu0 0.0
    %669 = vmatpush.msra.mxu0 0.0
    %670 = vmatpush.msra.mxu0 0.0
    %671 = vmatpush.msra.mxu0 0.0
    %672 = vmatpush.msra.mxu0 0.0
    %673 = vmatpush.msra.mxu0 0.0
    %674 = vmatpush.msra.mxu0 0.0
    %675 = vmatpush.msra.mxu0 %v652
    %676 = vmatpush.msra.mxu0 %v651
    %677 = vmatpush.msra.mxu0 %v650
    %678 = vmatpush.msra.mxu0 %v649
    %679 = vmatmul.f32.gmra.mxu0 %v658
    %v680 = vpop.f32.mrf.mxu0
    %v681 = vadd.f32 %v655, %v680
    %682 = vmatmul.f32.gmra.mxu0 %v661
    %v683 = vpop.f32.mrf.mxu0
    %v684 = vadd.f32 %v655, %v683
    %685 = vdwg.mxu0
    %v686 = vmax.f32 %v681, 0.0
    %v687 = vmax.f32 %v684, 0.0
    %v688 = vld [vmem:[%s13] sm:$0xff]
    %v689 = vld [vmem:[%s13 + $0x8] sm:$0xff]
    %v690 = vld [vmem:[%s13 + $0x10] sm:$0xff]
    %v691 = vld [vmem:[%s13 + $0x18] sm:$0xff]
    %v692 = vld [vmem:[%s13 + $0x20] sm:$0xff]
    %v693 = vld [vmem:[%s13 + $0x28] sm:$0xff]
    %v694 = vld [vmem:[%s13 + $0x30] sm:$0xff]
    %v695 = vld [vmem:[%s13 + $0x38] sm:$0xff]
    %v696 = vld [vmem:[%s13 + $0x40] sm:$0xff]
    %v697 = vld [vmem:[%s13 + $0x48] sm:$0xff]
    %v698 = vld [vmem:[%s13 + $0x50] sm:$0xff]
    %v699 = vld [vmem:[%s13 + $0x58] sm:$0xff]
    %v700 = vld [vmem:[%s13 + $0x60] sm:$0xff]
    %v701 = vld [vmem:[%s13 + $0x68] sm:$0xff]
    %v702 = vld [vmem:[%s13 + $0x70] sm:$0xff]
    %v703 = vld [vmem:[%s13 + $0x78] sm:$0xff]
    %v704 = vld [vmem:[%s14] sm:$0x1]
    %v706 = vperm.slane %v704, 0
    %708 = vmatpush.msra.mxu0 %v703
    %709 = vmatpush.msra.mxu0 %v702
    %710 = vmatpush.msra.mxu0 %v701
    %711 = vmatpush.msra.mxu0 %v700
    %712 = vmatpush.msra.mxu0 %v699
    %713 = vmatpush.msra.mxu0 %v698
    %714 = vmatpush.msra.mxu0 %v697
    %715 = vmatpush.msra.mxu0 %v696
    %716 = vmatpush.msra.mxu0 %v695
    %717 = vmatpush.msra.mxu0 %v694
    %718 = vmatpush.msra.mxu0 %v693
    %719 = vmatpush.msra.mxu0 %v692
    %720 = vmatpush.msra.mxu0 %v691
    %721 = vmatpush.msra.mxu0 %v690
    %722 = vmatpush.msra.mxu0 %v689
    %723 = vmatpush.msra.mxu0 %v688
    %724 = vmatmul.f32.gmra.mxu0 %v686
    %v725 = vpop.f32.mrf.mxu0
    %v726 = vadd.f32 %v706, %v725
    %727 = vmatmul.f32.gmra.mxu0 %v687
    %v728 = vpop.f32.mrf.mxu0
    %v729 = vadd.f32 %v706, %v728
    %730 = vdwg.mxu0
    %v731 = vadd.f32 %v591, %v726
    %v732 = vadd.f32 %v592, %v729
    %s733 = scalar_lea.vmem %s3, 1
    %v734 = vld [vmem:[%s733] sm:$0x1]
    %s735 = scalar_lea.vmem %s4, 1
    %v736 = vld [vmem:[%s735] sm:$0x1]
    %v737 = vsel %vm181, %v731, 0.0
    %738 = vadd.xlane.f32.xlu0 %v737
    %v739 = vpop.xlane.xlu0 %738
    %v740 = vsel %vm181, %v732, 0.0
    %741 = vadd.xlane.f32.xlu0 %v740
    %v742 = vpop.xlane.xlu0 %741
    %v743 = vmul.f32 %v739, %v194
    %v744 = vmul.f32 %v742, %v194
    %v745 = vsub.f32 %v731, %v743
    %v746 = vsub.f32 %v732, %v744
    %v747 = vmul.f32 %v745, %v745
    %v748 = vmul.f32 %v746, %v746
    %v749 = vsel %vm181, %v747, 0.0
    %750 = vadd.xlane.f32.xlu0 %v749
    %v751 = vpop.xlane.xlu0 %750
    %v752 = vsel %vm181, %v748, 0.0
    %753 = vadd.xlane.f32.xlu0 %v752
    %v754 = vpop.xlane.xlu0 %753
    %v755 = vmul.f32 %v751, %v194
    %v756 = vmul.f32 %v754, %v194
    %v757 = vadd.f32 %v755, 1e-05
    %v758 = vadd.f32 %v756, 1e-05
    %v759 = vrsqrt.pop %v757
    %v760 = vmul.f32 %v759, %v757
    %v761 = vmul.f32 %v760, %v759
    %v762 = vmul.f32 0.5, %v761
    %v763 = vsub.f32 1.5, %v762
    %v764 = vmul.f32 %v759, %v763
    %vm765 = vweird.f32 %v757
    %vm766 = vweird.f32 %v759
    %vm767 = vmor %vm765, %vm766
    %v768 = vsel %vm767, %v759, %v764
    %v769 = vrsqrt.pop %v758
    %v770 = vmul.f32 %v769, %v758
    %v771 = vmul.f32 %v770, %v769
    %v772 = vmul.f32 0.5, %v771
    %v773 = vsub.f32 1.5, %v772
    %v774 = vmul.f32 %v769, %v773
    %vm775 = vweird.f32 %v758
    %vm776 = vweird.f32 %v769
    %vm777 = vmor %vm775, %vm776
    %v778 = vsel %vm777, %v769, %v774
    %v779 = vmul.f32 %v745, %v768
    %v780 = vmul.f32 %v746, %v778
    %v782 = vperm.slane %v734, 0
    %v784 = vmul.f32 %v779, %v782
    %v785 = vmul.f32 %v780, %v782
    %v787 = vperm.slane %v736, 0
    %v789 = vadd.f32 %v784, %v787
    %v790 = vadd.f32 %v785, %v787
    %s791 = scalar_lea.vmem %s5, 32
    %v792 = vld [vmem:[%s791] sm:$0xff]
    %v793 = vld [vmem:[%s791 + $0x8] sm:$0xff]
    %v794 = vld [vmem:[%s791 + $0x10] sm:$0xff]
    %v795 = vld [vmem:[%s791 + $0x18] sm:$0xff]
    %s796 = scalar_lea.vmem %s6, 1
    %v797 = vld [vmem:[%s796] sm:$0x1]
    %v799 = vperm.slane %v797, 0
    %v802 = vsel %vm181, %v789, 0
    %v805 = vsel %vm181, %v790, 0
    %807 = vmatpush.msra.mxu0 0.0
    %808 = vmatpush.msra.mxu0 0.0
    %809 = vmatpush.msra.mxu0 0.0
    %810 = vmatpush.msra.mxu0 0.0
    %811 = vmatpush.msra.mxu0 0.0
    %812 = vmatpush.msra.mxu0 0.0
    %813 = vmatpush.msra.mxu0 0.0
    %814 = vmatpush.msra.mxu0 0.0
    %815 = vmatpush.msra.mxu0 0.0
    %816 = vmatpush.msra.mxu0 0.0
    %817 = vmatpush.msra.mxu0 0.0
    %818 = vmatpush.msra.mxu0 0.0
    %819 = vmatpush.msra.mxu0 %v795
    %820 = vmatpush.msra.mxu0 %v794
    %821 = vmatpush.msra.mxu0 %v793
    %822 = vmatpush.msra.mxu0 %v792
    %823 = vmatmul.f32.gmra.mxu0 %v802
    %v824 = vpop.f32.mrf.mxu0
    %v825 = vadd.f32 %v799, %v824
    %826 = vmatmul.f32.gmra.mxu0 %v805
    %v827 = vpop.f32.mrf.mxu0
    %v828 = vadd.f32 %v799, %v827
    %829 = vdwg.mxu0
    %831 = vrot.lane.b32.xlu0 %v825, 96
    %v832 = vpop.permute.xlu0 %831
    %v833 = vsel %vm283, %v825, 0
    %v835 = vsel %vm283, %v832, 0
    %837 = vmatpush.xpose.msra.mxu0 0.0
    %838 = vmatpush.xpose.msra.mxu0 0.0
    %839 = vmatpush.xpose.msra.mxu0 0.0
    %840 = vmatpush.xpose.msra.mxu0 0.0
    %841 = vmatpush.xpose.msra.mxu0 0.0
    %842 = vmatpush.xpose.msra.mxu0 0.0
    %843 = vmatpush.xpose.msra.mxu0 0.0
    %844 = vmatpush.xpose.msra.mxu0 0.0
    %845 = vmatpush.xpose.msra.mxu0 0.0
    %846 = vmatpush.xpose.msra.mxu0 0.0
    %847 = vmatpush.xpose.msra.mxu0 0.0
    %848 = vmatpush.xpose.msra.mxu0 0.0
    %849 = vmatpush.xpose.msra.mxu0 0.0
    %850 = vmatpush.xpose.msra.mxu0 0.0
    %851 = vmatpush.xpose.msra.mxu0 0.0
    %852 = vmatpush.xpose.msra.mxu0 %v835
    %853 = vmatmul.f32.gmra.mxu0 %v833
    %v854 = vpop.f32.mrf.mxu0
    %v855 = vadd.f32 0.0, %v854
    %856 = vdwg.mxu0
    %858 = vrot.lane.b32.xlu0 %v828, 96
    %v859 = vpop.permute.xlu0 %858
    %v860 = vsel %vm283, %v828, 0
    %v862 = vsel %vm283, %v859, 0
    %864 = vmatpush.xpose.msra.mxu0 0.0
    %865 = vmatpush.xpose.msra.mxu0 0.0
    %866 = vmatpush.xpose.msra.mxu0 0.0
    %867 = vmatpush.xpose.msra.mxu0 0.0
    %868 = vmatpush.xpose.msra.mxu0 0.0
    %869 = vmatpush.xpose.msra.mxu0 0.0
    %870 = vmatpush.xpose.msra.mxu0 0.0
    %871 = vmatpush.xpose.msra.mxu0 0.0
    %872 = vmatpush.xpose.msra.mxu0 0.0
    %873 = vmatpush.xpose.msra.mxu0 0.0
    %874 = vmatpush.xpose.msra.mxu0 0.0
    %875 = vmatpush.xpose.msra.mxu0 0.0
    %876 = vmatpush.xpose.msra.mxu0 0.0
    %877 = vmatpush.xpose.msra.mxu0 0.0
    %878 = vmatpush.xpose.msra.mxu0 0.0
    %879 = vmatpush.xpose.msra.mxu0 %v862
    %880 = vmatmul.f32.gmra.mxu0 %v860
    %v881 = vpop.f32.mrf.mxu0
    %v882 = vadd.f32 0.0, %v881
    %883 = vdwg.mxu0
    %v884 = vmul.f32 %v855, 0.25
    %v885 = vmul.f32 %v882, 0.25
    %v886 = vsel %vm337, %v884, -inf
    %887 = vmax.xlane.f32.xlu0 %v886
    %v888 = vpop.xlane.xlu0 %887
    %v889 = vsel %vm337, %v885, -inf
    %890 = vmax.xlane.f32.xlu0 %v889
    %v891 = vpop.xlane.xlu0 %890
    %v892 = vsub.f32 %v884, %v888
    %v893 = vsub.f32 %v885, %v891
    %v894 = vmul.f32 %v892, 1.442695
    %v895 = vpow.pop %v894
    %v896 = vmul.f32 %v893, 1.442695
    %v897 = vpow.pop %v896
    %v898 = vsel %vm337, %v895, 0.0
    %899 = vadd.xlane.f32.xlu0 %v898
    %v900 = vpop.xlane.xlu0 %899
    %v901 = vsel %vm337, %v897, 0.0
    %902 = vadd.xlane.f32.xlu0 %v901
    %v903 = vpop.xlane.xlu0 %902
    %v904 = vrcp.pop %v900
    %v905 = vrcp.pop %v903
    %v906 = vmul.f32 %v895, %v904
    %v907 = vmul.f32 %v897, %v905
    %908 = vrot.lane.b32.xlu0 %v825, 64
    %v909 = vpop.permute.xlu0 %908
    %v912 = vsel %vm337, %v906, 0
    %914 = vmatpush.msra.mxu0 0.0
    %915 = vmatpush.msra.mxu0 0.0
    %916 = vmatpush.msra.mxu0 0.0
    %917 = vmatpush.msra.mxu0 0.0
    %918 = vmatpush.msra.mxu0 0.0
    %919 = vmatpush.msra.mxu0 0.0
    %920 = vmatpush.msra.mxu0 0.0
    %921 = vmatpush.msra.mxu0 0.0
    %922 = vmatpush.msra.mxu0 0.0
    %923 = vmatpush.msra.mxu0 0.0
    %924 = vmatpush.msra.mxu0 0.0
    %925 = vmatpush.msra.mxu0 0.0
    %926 = vmatpush.msra.mxu0 0.0
    %927 = vmatpush.msra.mxu0 0.0
    %928 = vmatpush.msra.mxu0 0.0
    %929 = vmatpush.msra.mxu0 %v909
    %930 = vmatmul.f32.gmra.mxu0 %v912
    %v931 = vpop.f32.mrf.mxu0
    %v932 = vadd.f32 0.0, %v931
    %933 = vdwg.mxu0
    %934 = vrot.lane.b32.xlu0 %v828, 64
    %v935 = vpop.permute.xlu0 %934
    %v938 = vsel %vm337, %v907, 0
    %940 = vmatpush.msra.mxu0 0.0
    %941 = vmatpush.msra.mxu0 0.0
    %942 = vmatpush.msra.mxu0 0.0
    %943 = vmatpush.msra.mxu0 0.0
    %944 = vmatpush.msra.mxu0 0.0
    %945 = vmatpush.msra.mxu0 0.0
    %946 = vmatpush.msra.mxu0 0.0
    %947 = vmatpush.msra.mxu0 0.0
    %948 = vmatpush.msra.mxu0 0.0
    %949 = vmatpush.msra.mxu0 0.0
    %950 = vmatpush.msra.mxu0 0.0
    %951 = vmatpush.msra.mxu0 0.0
    %952 = vmatpush.msra.mxu0 0.0
    %953 = vmatpush.msra.mxu0 0.0
    %954 = vmatpush.msra.mxu0 0.0
    %955 = vmatpush.msra.mxu0 %v935
    %956 = vmatmul.f32.gmra.mxu0 %v938
    %v957 = vpop.f32.mrf.mxu0
    %v958 = vadd.f32 0.0, %v957
    %959 = vdwg.mxu0
    %960 = vrot.lane.b32.xlu0 %v825, 112
    %v961 = vpop.permute.xlu0 %960
    %962 = vrot.lane.b32.xlu0 %v825, 80
    %v963 = vpop.permute.xlu0 %962
    %v964 = vsel %vm283, %v961, 0
    %v966 = vsel %vm283, %v963, 0
    %968 = vmatpush.xpose.msra.mxu0 0.0
    %969 = vmatpush.xpose.msra.mxu0 0.0
    %970 = vmatpush.xpose.msra.mxu0 0.0
    %971 = vmatpush.xpose.msra.mxu0 0.0
    %972 = vmatpush.xpose.msra.mxu0 0.0
    %973 = vmatpush.xpose.msra.mxu0 0.0
    %974 = vmatpush.xpose.msra.mxu0 0.0
    %975 = vmatpush.xpose.msra.mxu0 0.0
    %976 = vmatpush.xpose.msra.mxu0 0.0
    %977 = vmatpush.xpose.msra.mxu0 0.0
    %978 = vmatpush.xpose.msra.mxu0 0.0
    %979 = vmatpush.xpose.msra.mxu0 0.0
    %980 = vmatpush.xpose.msra.mxu0 0.0
    %981 = vmatpush.xpose.msra.mxu0 0.0
    %982 = vmatpush.xpose.msra.mxu0 0.0
    %983 = vmatpush.xpose.msra.mxu0 %v966
    %984 = vmatmul.f32.gmra.mxu0 %v964
    %v985 = vpop.f32.mrf.mxu0
    %v986 = vadd.f32 0.0, %v985
    %987 = vdwg.mxu0
    %988 = vrot.lane.b32.xlu0 %v828, 112
    %v989 = vpop.permute.xlu0 %988
    %990 = vrot.lane.b32.xlu0 %v828, 80
    %v991 = vpop.permute.xlu0 %990
    %v992 = vsel %vm283, %v989, 0
    %v994 = vsel %vm283, %v991, 0
    %996 = vmatpush.xpose.msra.mxu0 0.0
    %997 = vmatpush.xpose.msra.mxu0 0.0
    %998 = vmatpush.xpose.msra.mxu0 0.0
    %999 = vmatpush.xpose.msra.mxu0 0.0
    %1000 = vmatpush.xpose.msra.mxu0 0.0
    %1001 = vmatpush.xpose.msra.mxu0 0.0
    %1002 = vmatpush.xpose.msra.mxu0 0.0
    %1003 = vmatpush.xpose.msra.mxu0 0.0
    %1004 = vmatpush.xpose.msra.mxu0 0.0
    %1005 = vmatpush.xpose.msra.mxu0 0.0
    %1006 = vmatpush.xpose.msra.mxu0 0.0
    %1007 = vmatpush.xpose.msra.mxu0 0.0
    %1008 = vmatpush.xpose.msra.mxu0 0.0
    %1009 = vmatpush.xpose.msra.mxu0 0.0
    %1010 = vmatpush.xpose.msra.mxu0 0.0
    %1011 = vmatpush.xpose.msra.mxu0 %v994
    %1012 = vmatmul.f32.gmra.mxu0 %v992
    %v1013 = vpop.f32.mrf.mxu0
    %v1014 = vadd.f32 0.0, %v1013
    %1015 = vdwg.mxu0
    %v1016 = vmul.f32 %v986, 0.25
    %v1017 = vmul.f32 %v1014, 0.25
    %v1018 = vsel %vm337, %v1016, -inf
    %1019 = vmax.xlane.f32.xlu0 %v1018
    %v1020 = vpop.xlane.xlu0 %1019
    %v1021 = vsel %vm337, %v1017, -inf
    %1022 = vmax.xlane.f32.xlu0 %v1021
    %v1023 = vpop.xlane.xlu0 %1022
    %v1024 = vsub.f32 %v1016, %v1020
    %v1025 = vsub.f32 %v1017, %v1023
    %v1026 = vmul.f32 %v1024, 1.442695
    %v1027 = vpow.pop %v1026
    %v1028 = vmul.f32 %v1025, 1.442695
    %v1029 = vpow.pop %v1028
    %v1030 = vsel %vm337, %v1027, 0.0
    %1031 = vadd.xlane.f32.xlu0 %v1030
    %v1032 = vpop.xlane.xlu0 %1031
    %v1033 = vsel %vm337, %v1029, 0.0
    %1034 = vadd.xlane.f32.xlu0 %v1033
    %v1035 = vpop.xlane.xlu0 %1034
    %v1036 = vrcp.pop %v1032
    %v1037 = vrcp.pop %v1035
    %v1038 = vmul.f32 %v1027, %v1036
    %v1039 = vmul.f32 %v1029, %v1037
    %1040 = vrot.lane.b32.xlu0 %v825, 48
    %v1041 = vpop.permute.xlu0 %1040
    %v1044 = vsel %vm337, %v1038, 0
    %1046 = vmatpush.msra.mxu0 0.0
    %1047 = vmatpush.msra.mxu0 0.0
    %1048 = vmatpush.msra.mxu0 0.0
    %1049 = vmatpush.msra.mxu0 0.0
    %1050 = vmatpush.msra.mxu0 0.0
    %1051 = vmatpush.msra.mxu0 0.0
    %1052 = vmatpush.msra.mxu0 0.0
    %1053 = vmatpush.msra.mxu0 0.0
    %1054 = vmatpush.msra.mxu0 0.0
    %1055 = vmatpush.msra.mxu0 0.0
    %1056 = vmatpush.msra.mxu0 0.0
    %1057 = vmatpush.msra.mxu0 0.0
    %1058 = vmatpush.msra.mxu0 0.0
    %1059 = vmatpush.msra.mxu0 0.0
    %1060 = vmatpush.msra.mxu0 0.0
    %1061 = vmatpush.msra.mxu0 %v1041
    %1062 = vmatmul.f32.gmra.mxu0 %v1044
    %v1063 = vpop.f32.mrf.mxu0
    %v1064 = vadd.f32 0.0, %v1063
    %1065 = vdwg.mxu0
    %1066 = vrot.lane.b32.xlu0 %v828, 48
    %v1067 = vpop.permute.xlu0 %1066
    %v1070 = vsel %vm337, %v1039, 0
    %1072 = vmatpush.msra.mxu0 0.0
    %1073 = vmatpush.msra.mxu0 0.0
    %1074 = vmatpush.msra.mxu0 0.0
    %1075 = vmatpush.msra.mxu0 0.0
    %1076 = vmatpush.msra.mxu0 0.0
    %1077 = vmatpush.msra.mxu0 0.0
    %1078 = vmatpush.msra.mxu0 0.0
    %1079 = vmatpush.msra.mxu0 0.0
    %1080 = vmatpush.msra.mxu0 0.0
    %1081 = vmatpush.msra.mxu0 0.0
    %1082 = vmatpush.msra.mxu0 0.0
    %1083 = vmatpush.msra.mxu0 0.0
    %1084 = vmatpush.msra.mxu0 0.0
    %1085 = vmatpush.msra.mxu0 0.0
    %1086 = vmatpush.msra.mxu0 0.0
    %1087 = vmatpush.msra.mxu0 %v1067
    %1088 = vmatmul.f32.gmra.mxu0 %v1070
    %v1089 = vpop.f32.mrf.mxu0
    %v1090 = vadd.f32 0.0, %v1089
    %1091 = vdwg.mxu0
    %1094 = vrot.lane.b32.xlu0 %v1064, 16
    %v1095 = vpop.permute.xlu0 %1094
    %1096 = vrot.lane.b32.xlu0 %v1090, 16
    %v1097 = vpop.permute.xlu0 %1096
    %v1100 = vsel %vm283, %v932, %v1095
    %v1101 = vsel %vm283, %v958, %v1097
    %s1102 = scalar_lea.vmem %s7, 32
    %v1103 = vld [vmem:[%s1102] sm:$0xff]
    %v1104 = vld [vmem:[%s1102 + $0x8] sm:$0xff]
    %v1105 = vld [vmem:[%s1102 + $0x10] sm:$0xff]
    %v1106 = vld [vmem:[%s1102 + $0x18] sm:$0xff]
    %s1107 = scalar_lea.vmem %s8, 1
    %v1108 = vld [vmem:[%s1107] sm:$0x1]
    %v1110 = vperm.slane %v1108, 0
    %v1113 = vsel %vm181, %v1100, 0
    %v1116 = vsel %vm181, %v1101, 0
    %1118 = vmatpush.msra.mxu0 0.0
    %1119 = vmatpush.msra.mxu0 0.0
    %1120 = vmatpush.msra.mxu0 0.0
    %1121 = vmatpush.msra.mxu0 0.0
    %1122 = vmatpush.msra.mxu0 0.0
    %1123 = vmatpush.msra.mxu0 0.0
    %1124 = vmatpush.msra.mxu0 0.0
    %1125 = vmatpush.msra.mxu0 0.0
    %1126 = vmatpush.msra.mxu0 0.0
    %1127 = vmatpush.msra.mxu0 0.0
    %1128 = vmatpush.msra.mxu0 0.0
    %1129 = vmatpush.msra.mxu0 0.0
    %1130 = vmatpush.msra.mxu0 %v1106
    %1131 = vmatpush.msra.mxu0 %v1105
    %1132 = vmatpush.msra.mxu0 %v1104
    %1133 = vmatpush.msra.mxu0 %v1103
    %1134 = vmatmul.f32.gmra.mxu0 %v1113
    %v1135 = vpop.f32.mrf.mxu0
    %v1136 = vadd.f32 %v1110, %v1135
    %1137 = vmatmul.f32.gmra.mxu0 %v1116
    %v1138 = vpop.f32.mrf.mxu0
    %v1139 = vadd.f32 %v1110, %v1138
    %1140 = vdwg.mxu0
    %v1141 = vadd.f32 %v731, %v1136
    %v1142 = vadd.f32 %v732, %v1139
    %s1143 = scalar_lea.vmem %s9, 1
    %v1144 = vld [vmem:[%s1143] sm:$0x1]
    %s1145 = scalar_lea.vmem %s10, 1
    %v1146 = vld [vmem:[%s1145] sm:$0x1]
    %v1147 = vsel %vm181, %v1141, 0.0
    %1148 = vadd.xlane.f32.xlu0 %v1147
    %v1149 = vpop.xlane.xlu0 %1148
    %v1150 = vsel %vm181, %v1142, 0.0
    %1151 = vadd.xlane.f32.xlu0 %v1150
    %v1152 = vpop.xlane.xlu0 %1151
    %v1153 = vmul.f32 %v1149, %v194
    %v1154 = vmul.f32 %v1152, %v194
    %v1155 = vsub.f32 %v1141, %v1153
    %v1156 = vsub.f32 %v1142, %v1154
    %v1157 = vmul.f32 %v1155, %v1155
    %v1158 = vmul.f32 %v1156, %v1156
    %v1159 = vsel %vm181, %v1157, 0.0
    %1160 = vadd.xlane.f32.xlu0 %v1159
    %v1161 = vpop.xlane.xlu0 %1160
    %v1162 = vsel %vm181, %v1158, 0.0
    %1163 = vadd.xlane.f32.xlu0 %v1162
    %v1164 = vpop.xlane.xlu0 %1163
    %v1165 = vmul.f32 %v1161, %v194
    %v1166 = vmul.f32 %v1164, %v194
    %v1167 = vadd.f32 %v1165, 1e-05
    %v1168 = vadd.f32 %v1166, 1e-05
    %v1169 = vrsqrt.pop %v1167
    %v1170 = vmul.f32 %v1169, %v1167
    %v1171 = vmul.f32 %v1170, %v1169
    %v1172 = vmul.f32 0.5, %v1171
    %v1173 = vsub.f32 1.5, %v1172
    %v1174 = vmul.f32 %v1169, %v1173
    %vm1175 = vweird.f32 %v1167
    %vm1176 = vweird.f32 %v1169
    %vm1177 = vmor %vm1175, %vm1176
    %v1178 = vsel %vm1177, %v1169, %v1174
    %v1179 = vrsqrt.pop %v1168
    %v1180 = vmul.f32 %v1179, %v1168
    %v1181 = vmul.f32 %v1180, %v1179
    %v1182 = vmul.f32 0.5, %v1181
    %v1183 = vsub.f32 1.5, %v1182
    %v1184 = vmul.f32 %v1179, %v1183
    %vm1185 = vweird.f32 %v1168
    %vm1186 = vweird.f32 %v1179
    %vm1187 = vmor %vm1185, %vm1186
    %v1188 = vsel %vm1187, %v1179, %v1184
    %v1189 = vmul.f32 %v1155, %v1178
    %v1190 = vmul.f32 %v1156, %v1188
    %v1192 = vperm.slane %v1144, 0
    %v1194 = vmul.f32 %v1189, %v1192
    %v1195 = vmul.f32 %v1190, %v1192
    %v1197 = vperm.slane %v1146, 0
    %v1199 = vadd.f32 %v1194, %v1197
    %v1200 = vadd.f32 %v1195, %v1197
    %s1201 = scalar_lea.vmem %s11, 32
    %v1202 = vld [vmem:[%s1201] sm:$0xff]
    %v1203 = vld [vmem:[%s1201 + $0x8] sm:$0xff]
    %v1204 = vld [vmem:[%s1201 + $0x10] sm:$0xff]
    %v1205 = vld [vmem:[%s1201 + $0x18] sm:$0xff]
    %s1206 = scalar_lea.vmem %s12, 1
    %v1207 = vld [vmem:[%s1206] sm:$0x1]
    %v1209 = vperm.slane %v1207, 0
    %v1212 = vsel %vm181, %v1199, 0
    %v1215 = vsel %vm181, %v1200, 0
    %1217 = vmatpush.msra.mxu0 0.0
    %1218 = vmatpush.msra.mxu0 0.0
    %1219 = vmatpush.msra.mxu0 0.0
    %1220 = vmatpush.msra.mxu0 0.0
    %1221 = vmatpush.msra.mxu0 0.0
    %1222 = vmatpush.msra.mxu0 0.0
    %1223 = vmatpush.msra.mxu0 0.0
    %1224 = vmatpush.msra.mxu0 0.0
    %1225 = vmatpush.msra.mxu0 0.0
    %1226 = vmatpush.msra.mxu0 0.0
    %1227 = vmatpush.msra.mxu0 0.0
    %1228 = vmatpush.msra.mxu0 0.0
    %1229 = vmatpush.msra.mxu0 %v1205
    %1230 = vmatpush.msra.mxu0 %v1204
    %1231 = vmatpush.msra.mxu0 %v1203
    %1232 = vmatpush.msra.mxu0 %v1202
    %1233 = vmatmul.f32.gmra.mxu0 %v1212
    %v1234 = vpop.f32.mrf.mxu0
    %v1235 = vadd.f32 %v1209, %v1234
    %1236 = vmatmul.f32.gmra.mxu0 %v1215
    %v1237 = vpop.f32.mrf.mxu0
    %v1238 = vadd.f32 %v1209, %v1237
    %1239 = vdwg.mxu0
    %v1240 = vmax.f32 %v1235, 0.0
    %v1241 = vmax.f32 %v1238, 0.0
    %s1242 = scalar_lea.vmem %s13, 128
    %v1243 = vld [vmem:[%s1242] sm:$0xff]
    %v1244 = vld [vmem:[%s1242 + $0x8] sm:$0xff]
    %v1245 = vld [vmem:[%s1242 + $0x10] sm:$0xff]
    %v1246 = vld [vmem:[%s1242 + $0x18] sm:$0xff]
    %v1247 = vld [vmem:[%s1242 + $0x20] sm:$0xff]
    %v1248 = vld [vmem:[%s1242 + $0x28] sm:$0xff]
    %v1249 = vld [vmem:[%s1242 + $0x30] sm:$0xff]
    %v1250 = vld [vmem:[%s1242 + $0x38] sm:$0xff]
    %v1251 = vld [vmem:[%s1242 + $0x40] sm:$0xff]
    %v1252 = vld [vmem:[%s1242 + $0x48] sm:$0xff]
    %v1253 = vld [vmem:[%s1242 + $0x50] sm:$0xff]
    %v1254 = vld [vmem:[%s1242 + $0x58] sm:$0xff]
    %v1255 = vld [vmem:[%s1242 + $0x60] sm:$0xff]
    %v1256 = vld [vmem:[%s1242 + $0x68] sm:$0xff]
    %v1257 = vld [vmem:[%s1242 + $0x70] sm:$0xff]
    %v1258 = vld [vmem:[%s1242 + $0x78] sm:$0xff]
    %s1259 = scalar_lea.vmem %s14, 1
    %v1260 = vld [vmem:[%s1259] sm:$0x1]
    %v1262 = vperm.slane %v1260, 0
    %1264 = vmatpush.msra.mxu0 %v1258
    %1265 = vmatpush.msra.mxu0 %v1257
    %1266 = vmatpush.msra.mxu0 %v1256
    %1267 = vmatpush.msra.mxu0 %v1255
    %1268 = vmatpush.msra.mxu0 %v1254
    %1269 = vmatpush.msra.mxu0 %v1253
    %1270 = vmatpush.msra.mxu0 %v1252
    %1271 = vmatpush.msra.mxu0 %v1251
    %1272 = vmatpush.msra.mxu0 %v1250
    %1273 = vmatpush.msra.mxu0 %v1249
    %1274 = vmatpush.msra.mxu0 %v1248
    %1275 = vmatpush.msra.mxu0 %v1247
    %1276 = vmatpush.msra.mxu0 %v1246
    %1277 = vmatpush.msra.mxu0 %v1245
    %1278 = vmatpush.msra.mxu0 %v1244
    %1279 = vmatpush.msra.mxu0 %v1243
    %1280 = vmatmul.f32.gmra.mxu0 %v1240
    %v1281 = vpop.f32.mrf.mxu0
    %v1282 = vadd.f32 %v1262, %v1281
    %1283 = vmatmul.f32.gmra.mxu0 %v1241
    %v1284 = vpop.f32.mrf.mxu0
    %v1285 = vadd.f32 %v1262, %v1284
    %1286 = vdwg.mxu0
    %v1287 = vadd.f32 %v1141, %v1282
    %v1288 = vadd.f32 %v1142, %v1285
    %1289 = vrot.lane.b32.xlu0 %v490, 8
    %v1290 = vpop.permute.xlu0 %1289
    %1291 = vrot.lane.b32.xlu0 %v491, 8
    %v1292 = vpop.permute.xlu0 %1291
    %1295 = vrot.lane.b32.xlu0 %v906, 16
    %v1296 = vpop.permute.xlu0 %1295
    %1297 = vrot.lane.b32.xlu0 %v907, 16
    %v1298 = vpop.permute.xlu0 %1297
    %1301 = vrot.lane.b32.xlu0 %v1038, 24
    %v1302 = vpop.permute.xlu0 %1301
    %1303 = vrot.lane.b32.xlu0 %v1039, 24
    %v1304 = vpop.permute.xlu0 %1303
    %v1307 = vsel %vm337, %v358, %v1290
    %v1308 = vsel %vm337, %v359, %v1292
    %v1309 = vsel %vm283, %v1307, %v1296
    %v1310 = vsel %vm283, %v1308, %v1298
    %vm1311 = vcmask 195584
    %v1312 = vsel %vm1311, %v1309, %v1302
    %v1313 = vsel %vm1311, %v1310, %v1304
    %1314 = vst.msk [vmem:[%s22] sm:$0xff] %vm181, %v1312
    %1315 = vst.msk [vmem:[%s22 + $0x8] sm:$0xff] %vm181, %v1313
    %v1316 = vld [vmem:[%s15] sm:$0x1]
    %v1317 = vld [vmem:[%s16] sm:$0x1]
    %v1318 = vsel %vm181, %v1287, 0.0
    %1319 = vadd.xlane.f32.xlu0 %v1318
    %v1320 = vpop.xlane.xlu0 %1319
    %v1321 = vsel %vm181, %v1288, 0.0
    %1322 = vadd.xlane.f32.xlu0 %v1321
    %v1323 = vpop.xlane.xlu0 %1322
    %v1324 = vmul.f32 %v1320, %v194
    %v1325 = vmul.f32 %v1323, %v194
    %v1326 = vsub.f32 %v1287, %v1324
    %v1327 = vsub.f32 %v1288, %v1325
    %v1328 = vmul.f32 %v1326, %v1326
    %v1329 = vmul.f32 %v1327, %v1327
    %v1330 = vsel %vm181, %v1328, 0.0
    %1331 = vadd.xlane.f32.xlu0 %v1330
    %v1332 = vpop.xlane.xlu0 %1331
    %v1333 = vsel %vm181, %v1329, 0.0
    %1334 = vadd.xlane.f32.xlu0 %v1333
    %v1335 = vpop.xlane.xlu0 %1334
    %v1336 = vmul.f32 %v1332, %v194
    %v1337 = vmul.f32 %v1335, %v194
    %v1338 = vadd.f32 %v1336, 1e-05
    %v1339 = vadd.f32 %v1337, 1e-05
    %v1340 = vrsqrt.pop %v1338
    %v1341 = vmul.f32 %v1340, %v1338
    %v1342 = vmul.f32 %v1341, %v1340
    %v1343 = vmul.f32 0.5, %v1342
    %v1344 = vsub.f32 1.5, %v1343
    %v1345 = vmul.f32 %v1340, %v1344
    %vm1346 = vweird.f32 %v1338
    %vm1347 = vweird.f32 %v1340
    %vm1348 = vmor %vm1346, %vm1347
    %v1349 = vsel %vm1348, %v1340, %v1345
    %v1350 = vrsqrt.pop %v1339
    %v1351 = vmul.f32 %v1350, %v1339
    %v1352 = vmul.f32 %v1351, %v1350
    %v1353 = vmul.f32 0.5, %v1352
    %v1354 = vsub.f32 1.5, %v1353
    %v1355 = vmul.f32 %v1350, %v1354
    %vm1356 = vweird.f32 %v1339
    %vm1357 = vweird.f32 %v1350
    %vm1358 = vmor %vm1356, %vm1357
    %v1359 = vsel %vm1358, %v1350, %v1355
    %v1360 = vmul.f32 %v1326, %v1349
    %v1361 = vmul.f32 %v1327, %v1359
    %v1363 = vperm.slane %v1316, 0
    %v1365 = vmul.f32 %v1360, %v1363
    %v1366 = vmul.f32 %v1361, %v1363
    %v1368 = vperm.slane %v1317, 0
    %v1370 = vadd.f32 %v1365, %v1368
    %v1371 = vadd.f32 %v1366, %v1368
    %v1372 = vlaneseq
    %v1373 = vand.u32 %v1372, 127
    %v1374 = vmul.u32 %v72, 8
    %vm1375 = vcmp.ge.s32.totalorder %v1373, %v1374
    %v1376 = vadd.s32 %v72, 1
    %v1377 = vmul.u32 %v1376, 8
    %vm1378 = vcmp.lt.s32.totalorder %v1373, %v1377
    %vm1379 = vmand %vm1375, %vm1378
    %v1380 = vsel %vm1379, 1, 0
    %v1381 = vcvt.s32.f32 %v1380
    %v1382 = vmul.f32 %v1381, 0.125
    %v1384 = vsel %vm283, %v1382, 0
    %1386 = vmatpush.msra.mxu0 0.0
    %1387 = vmatpush.msra.mxu0 0.0
    %1388 = vmatpush.msra.mxu0 0.0
    %1389 = vmatpush.msra.mxu0 0.0
    %1390 = vmatpush.msra.mxu0 0.0
    %1391 = vmatpush.msra.mxu0 0.0
    %1392 = vmatpush.msra.mxu0 0.0
    %1393 = vmatpush.msra.mxu0 0.0
    %1394 = vmatpush.msra.mxu0 0.0
    %1395 = vmatpush.msra.mxu0 0.0
    %1396 = vmatpush.msra.mxu0 0.0
    %1397 = vmatpush.msra.mxu0 0.0
    %1398 = vmatpush.msra.mxu0 0.0
    %1399 = vmatpush.msra.mxu0 0.0
    %1400 = vmatpush.msra.mxu0 %v1371
    %1401 = vmatpush.msra.mxu0 %v1370
    %1402 = vmatmul.f32.gmra.mxu0 %v1384
    %v1403 = vpop.f32.mrf.mxu0
    %v1404 = vadd.f32 0.0, %v1403
    %1405 = vdwg.mxu0
    %v1406 = vld [vmem:[%s17] sm:$0xff]
    %v1407 = vld [vmem:[%s17 + $0x8] sm:$0xff]
    %v1408 = vld [vmem:[%s17 + $0x10] sm:$0xff]
    %v1409 = vld [vmem:[%s17 + $0x18] sm:$0xff]
    %v1410 = vld [vmem:[%s18] sm:$0x1]
    %v1412 = vperm.slane %v1410, 0
    %v1415 = vsel %vm181, %v1404, 0
    %1417 = vmatpush.msra.mxu0 0.0
    %1418 = vmatpush.msra.mxu0 0.0
    %1419 = vmatpush.msra.mxu0 0.0
    %1420 = vmatpush.msra.mxu0 0.0
    %1421 = vmatpush.msra.mxu0 0.0
    %1422 = vmatpush.msra.mxu0 0.0
    %1423 = vmatpush.msra.mxu0 0.0
    %1424 = vmatpush.msra.mxu0 0.0
    %1425 = vmatpush.msra.mxu0 0.0
    %1426 = vmatpush.msra.mxu0 0.0
    %1427 = vmatpush.msra.mxu0 0.0
    %1428 = vmatpush.msra.mxu0 0.0
    %1429 = vmatpush.msra.mxu0 %v1409
    %1430 = vmatpush.msra.mxu0 %v1408
    %1431 = vmatpush.msra.mxu0 %v1407
    %1432 = vmatpush.msra.mxu0 %v1406
    %1433 = vmatmul.f32.gmra.mxu0 %v1415
    %v1434 = vpop.f32.mrf.mxu0
    %v1435 = vadd.f32 %v1412, %v1434
    %1436 = vdwg.mxu0
    %v1437 = vmax.f32 %v1435, 0.0
    %v1438 = vld [vmem:[%s19] sm:$0xff]
    %v1439 = vld [vmem:[%s19 + $0x8] sm:$0xff]
    %v1440 = vld [vmem:[%s19 + $0x10] sm:$0xff]
    %v1441 = vld [vmem:[%s19 + $0x18] sm:$0xff]
    %v1442 = vld [vmem:[%s20] sm:$0x1]
    %v1444 = vperm.slane %v1442, 0
    %v1447 = vsel %vm181, %v1437, 0
    %1449 = vmatpush.msra.mxu0 0.0
    %1450 = vmatpush.msra.mxu0 0.0
    %1451 = vmatpush.msra.mxu0 0.0
    %1452 = vmatpush.msra.mxu0 0.0
    %1453 = vmatpush.msra.mxu0 0.0
    %1454 = vmatpush.msra.mxu0 0.0
    %1455 = vmatpush.msra.mxu0 0.0
    %1456 = vmatpush.msra.mxu0 0.0
    %1457 = vmatpush.msra.mxu0 0.0
    %1458 = vmatpush.msra.mxu0 0.0
    %1459 = vmatpush.msra.mxu0 0.0
    %1460 = vmatpush.msra.mxu0 0.0
    %1461 = vmatpush.msra.mxu0 %v1441
    %1462 = vmatpush.msra.mxu0 %v1440
    %1463 = vmatpush.msra.mxu0 %v1439
    %1464 = vmatpush.msra.mxu0 %v1438
    %1465 = vmatmul.f32.gmra.mxu0 %v1447
    %v1466 = vpop.f32.mrf.mxu0
    %v1467 = vadd.f32 %v1444, %v1466
    %1468 = vdwg.mxu0
    %vm1469 = vcmask 17408
    %v1470 = vsel %vm1469, %v1467, -inf
    %1471 = vmax.xlane.f32.xlu0 %v1470
    %v1472 = vpop.xlane.xlu0 %1471
    %v1473 = vsub.f32 %v1467, %v1472
    %v1474 = vmul.f32 %v1473, 1.442695
    %v1475 = vpow.pop %v1474
    %v1476 = vsel %vm1469, %v1475, 0.0
    %1477 = vadd.xlane.f32.xlu0 %v1476
    %v1478 = vpop.xlane.xlu0 %1477
    %v1479 = vlog2.pop %v1478
    %v1480 = vmul.f32 %v1479, 0.6931472
    %v1481 = vsub.f32 %v1473, %v1480
    %1482 = vst.msk [vmem:[#allocation2] sm:$0x3] %vm1469, %v1481
    // Predicated region
    $region86: #{nn1dan_forward.1} parent=1 // pred_check
      _
    $region87: #{nn1dan_forward.1} parent=1 // pred_check_branch
      %1484 = sbr.rel (0) target = $region89
    $region88: #{nn1dan_forward.1} parent=1 // pred_region
      %1486 = vsyncadd [#allocation3], 0
      %s1488 = sshll.u32 [#allocation2], 4
      %s1489 = int_to_ptr.vmem [resolvable:$true] %s1488
      %s1490 = sshll.u32 %s21, 4
      %s1491 = int_to_ptr.hbm [resolvable:$true] %s1490
      %1493 = dma.vmem_to_hbm [thread:$0]  %s1489, 32, %s1491, [#allocation3]
    $region89: #{nn1dan_forward.1} parent=1 // pred_fallthru
      _
    // Predicated region
    $region90: #{nn1dan_forward.1} parent=1 // pred_check
      _
    $region91: #{nn1dan_forward.1} parent=1 // pred_check_branch
      %1495 = sbr.rel (0) target = $region93
    $region92: #{nn1dan_forward.1} parent=1 // pred_region
      _
    $region93: #{nn1dan_forward.1} parent=1 // pred_fallthru
      _
    // Predicated region
    $region94: #{nn1dan_forward.1} parent=1 // pred_check
      _
    $region95: #{nn1dan_forward.1} parent=1 // pred_check_branch
      %1497 = sbr.rel (0) target = $region97
    $region96: #{nn1dan_forward.1} parent=1 // pred_region
      %1499 = dma.done [#allocation3], 32
    $region97: #{nn1dan_forward.1} parent=1 // pred_fallthru
      _
    // Predicated region
    $region98: #{nn1dan_forward.1} parent=1 // pred_check
      _
    $region99: #{nn1dan_forward.1} parent=1 // pred_check_branch
      %1501 = sbr.rel (0) target = $region101
    $region100: #{nn1dan_forward.1} parent=1 // pred_region
      _
    $region101: #{nn1dan_forward.1} parent=1 // pred_fallthru
      _
    %1502 = vsyncpa [#allocation3], 1

</llo_original>
